<compile_context>
chip_gen: v7x
topology: tpu7x:2x2x1
jax: 0.10.0
libtpu: 0.0.40
codegen_flags: <defaults>
</compile_context>

<pallas_src>
import numpy as np
import jax
import jax.numpy as jnp
from jax.experimental import pallas as pl
from jax.experimental.pallas import tpu as pltpu

# norse.LIFParameters() defaults
DT = 1e-3
TAU_MEM_INV = 100.0      # 1 / 1e-2
TAU_SYN_INV = 200.0      # 1 / 5e-3
V_TH = 1.0
DT_TAU_MEM = DT * TAU_MEM_INV   # 0.1
DT_TAU_SYN = DT * TAU_SYN_INV   # 0.2

H = W = 16
KH = KW = 4
C_OUT = 2
OH = OW = 13            # (16 - 4 + 1)
PH = PW = 6             # floor(13 / 2)
FLAT = C_OUT * PH * PW  # 72
LANE = 128              # lane-padded feature width


def build_conv_pool_mats(conv_w, conv_b):
    """Fold conv(1->2,4x4,s1) + maxpool(2) selection into one (256, 4*128) matrix.

    Column block k (k = dy*2 + dx) maps the flat spike image to the conv output
    at pool-window offset (dy, dx); columns 72..127 of each block are zero pad
    so the 4-way max in the kernel works on whole 128-lane vreg groups.
    Returns (wcat (256, 512) jnp array, bc (72,) numpy per-column conv bias).
    """
    w = np.asarray(conv_w, np.float32)   # (2, 1, 4, 4)
    b = np.asarray(conv_b, np.float32)   # (2,)
    mats = np.zeros((4, H * W, LANE), np.float32)
    for dy in range(2):
        for dx in range(2):
            k = dy * 2 + dx
            for c in range(C_OUT):
                for py in range(PH):
                    for px in range(PW):
                        oy, ox = 2 * py + dy, 2 * px + dx
                        col = c * PH * PW + py * PW + px
                        for ky in range(KH):
                            for kx in range(KW):
                                mats[k, (oy + ky) * W + (ox + kx), col] = w[c, 0, ky, kx]
    wcat = np.concatenate([mats[k] for k in range(4)], axis=1)  # (256, 512)
    bc = np.repeat(b, PH * PW).astype(np.float32)               # (72,)
    return jnp.asarray(wcat), bc


def snn_kernel(x_ref, wc_ref, wl_ref, bl_ref,
               spk_out_ref, mem_rec_ref, spk_rec_ref,
               z_ref):
    # x_ref:  (B, 256)   input current (already x*10, flattened)
    # wc_ref: (256, 512) fused conv+pool matrices, 4 x 128-lane groups
    # wl_ref: (128, 128) zero-padded linear weight (transposed)
    # bl_ref: (1, 128)   folded bias (bc @ wl^T + bl), zero padded
    # outputs are lane-dense (padded to 128 cols); wrapper slices to OUT.
    num_steps = mem_rec_ref.shape[0]
    B = x_ref.shape[0]

    x = x_ref[...]                               # (B, 256)

    # --- Phase 1: constant_current_lif_encode for all timesteps (VPU only,
    #     fully unrolled, state in vregs) -> spike slab in VMEM scratch -----
    v_e = jnp.zeros_like(x)
    for t in range(num_steps):
        v_e = v_e + DT_TAU_MEM * (x - v_e)
        z_e = (v_e > V_TH).astype(jnp.float32)
        v_e = (1.0 - z_e) * v_e                  # reset to v_reset = 0
        z_ref[pl.ds(t * B, B), :] = z_e

    # --- Phase 2: ONE conv matmul + lane-aligned pool-max + ONE linear
    #     matmul for all timesteps at once (M = num_steps * B) -------------
    z_all = z_ref[...]                                                    # (T*B, 256)
    p = jnp.dot(z_all, wc_ref[...], preferred_element_type=jnp.float32)   # (T*B, 512)
    pooled = jnp.maximum(jnp.maximum(p[:, 0:128], p[:, 128:256]),
                         jnp.maximum(p[:, 256:384], p[:, 384:512]))       # (T*B, 128)
    lin = jnp.dot(pooled, wl_ref[...],
                  preferred_element_type=jnp.float32) + bl_ref[...]       # (T*B, 128)

    # --- Phase 3: norse.LIFCell recurrence (VPU only, fully unrolled,
    #     state in vregs); lane-dense record stores --------------------------
    v = jnp.zeros((B, LANE), jnp.float32)        # LIFCell init: v = v_leak = 0
    i = jnp.zeros((B, LANE), jnp.float32)
    acc = jnp.zeros((B, LANE), jnp.float32)
    for t in range(num_steps):
        v_dec = v + DT_TAU_MEM * (i - v)
        i_dec = i - DT_TAU_SYN * i
        z = (v_dec - V_TH > 0.0).astype(jnp.float32)   # super-spike fwd = heaviside
        v = (1.0 - z) * v_dec                          # v_reset = 0
        i = i_dec + lin[t * B:(t + 1) * B, :]
        acc = acc + z
        mem_rec_ref[t] = v
        spk_rec_ref[t] = z
    spk_out_ref[...] = acc


def simple_snn_forward(x, conv_w, conv_b, lin_w, lin_b, num_steps):
    """x: (B, 1, 16, 16) float32 (NCHW).  Returns (spk_out, mem_record, spk_record)."""
    B = x.shape[0]
    out_size = lin_w.shape[0]

    wcat, bc = build_conv_pool_mats(conv_w, conv_b)
    x_flat = (x * 10.0).reshape(B, H * W).astype(jnp.float32)   # glue: scale + flatten

    # Fold conv bias into the linear bias and zero-pad weight/bias to 128 lanes.
    wl_np = np.asarray(lin_w, np.float32)                        # (OUT, 72)
    bl_np = np.asarray(lin_b, np.float32)                        # (OUT,)
    bl_fold = bc @ wl_np.T + bl_np                               # (OUT,)
    wl_pad = np.zeros((LANE, LANE), np.float32)
    wl_pad[:FLAT, :out_size] = wl_np.T
    bl_pad = np.zeros((1, LANE), np.float32)
    bl_pad[0, :out_size] = bl_fold

    vmem = lambda: pl.BlockSpec(memory_space=pltpu.MemorySpace.VMEM)
    call = pl.pallas_call(
        snn_kernel,
        out_shape=(
            jax.ShapeDtypeStruct((B, LANE), jnp.float32),
            jax.ShapeDtypeStruct((num_steps, B, LANE), jnp.float32),
            jax.ShapeDtypeStruct((num_steps, B, LANE), jnp.float32),
        ),
        in_specs=[vmem() for _ in range(4)],
        out_specs=(vmem(), vmem(), vmem()),
        scratch_shapes=[
            pltpu.VMEM((num_steps * B, H * W), jnp.float32),     # all encoder spikes
        ],
    )
    # TODO(synk): for large B, add a batch grid with dimension_semantics=("parallel",)
    # so v7x's 2 TensorCores both run; at B=2 a single program is optimal.
    spk_out, mem_rec, spk_rec = call(x_flat, jnp.asarray(wcat),
                                     jnp.asarray(wl_pad), jnp.asarray(bl_pad))
    # Slice the lane padding (128 -> real output width) outside the kernel.
    return (spk_out[:, :out_size],
            mem_rec[:, :, :out_size],
            spk_rec[:, :, :out_size])


def reference_forward(x, conv_w, conv_b, lin_w, lin_b, num_steps):
    """Pure-JAX reference of the PyTorch forward (for correctness check)."""
    B = x.shape[0]
    out_size = lin_w.shape[0]
    cur = x * 10.0
    v_enc = jnp.zeros_like(cur)
    v = jnp.zeros((B, out_size), jnp.float32)
    i = jnp.zeros((B, out_size), jnp.float32)
    mems, spks = [], []
    for _ in range(num_steps):
        v_enc = v_enc + DT_TAU_MEM * (cur - v_enc)
        z_e = (v_enc > V_TH).astype(jnp.float32)
        v_enc = (1.0 - z_e) * v_enc
        conv = jax.lax.conv_general_dilated(
            z_e, conv_w, window_strides=(1, 1), padding="VALID",
            dimension_numbers=("NCHW", "OIHW", "NCHW")) + conv_b[None, :, None, None]
        pooled = jax.lax.reduce_window(conv, -jnp.inf, jax.lax.max,
                                       (1, 1, 2, 2), (1, 1, 2, 2), "VALID")
        flat = pooled.reshape(B, -1)
        lin = flat @ lin_w.T + lin_b[None, :]
        v_dec = v + DT_TAU_MEM * (i - v)
        i_dec = i - DT_TAU_SYN * i
        z = (v_dec - V_TH > 0.0).astype(jnp.float32)
        v = (1.0 - z) * v_dec
        i = i_dec + lin
        mems.append(v)
        spks.append(z)
    return sum(spks), jnp.stack(mems), jnp.stack(spks)


if __name__ == "__main__":
    B, OUT_SIZE, NUM_STEPS = 2, 10, 8

    key = jax.random.PRNGKey(0)
    kx, kw1, kb1, kw2, kb2 = jax.random.split(key, 5)

    # deterministic synthetic parameters (shapes from the module's __init__)
    x = jax.random.uniform(kx, (B, 1, H, W), jnp.float32)
    cbound = 1.0 / np.sqrt(1 * KH * KW)
    conv_w = jax.random.uniform(kw1, (C_OUT, 1, KH, KW), jnp.float32, -cbound, cbound)
    conv_b = jax.random.uniform(kb1, (C_OUT,), jnp.float32, -cbound, cbound)
    lbound = 1.0 / np.sqrt(FLAT)
    lin_w = jax.random.uniform(kw2, (OUT_SIZE, FLAT), jnp.float32, -lbound, lbound)
    lin_b = jax.random.uniform(kb2, (OUT_SIZE,), jnp.float32, -lbound, lbound)

    spk_out, mem_rec, spk_rec = simple_snn_forward(
        x, conv_w, conv_b, lin_w, lin_b, NUM_STEPS)
    jax.block_until_ready((spk_out, mem_rec, spk_rec))

    ref_spk_out, ref_mem, ref_spk = reference_forward(
        x, conv_w, conv_b, lin_w, lin_b, NUM_STEPS)
    assert spk_out.shape == (B, OUT_SIZE)
    assert mem_rec.shape == (NUM_STEPS, B, OUT_SIZE)
    assert spk_rec.shape == (NUM_STEPS, B, OUT_SIZE)
    assert jnp.allclose(spk_out, ref_spk_out, atol=1e-3)
    assert jnp.allclose(mem_rec, ref_mem, atol=1e-3)
    assert jnp.allclose(spk_rec, ref_spk, atol=1e-3)

    print("KERNEL_OK")
</pallas_src>

<mosaic_0001>
module attributes {stable_mosaic.version = 11 : i64} {
  func.func @snn_kernel(%arg0: memref<2x256xf32, #tpu.memory_space<vmem>>, %arg1: memref<256x512xf32, #tpu.memory_space<vmem>>, %arg2: memref<128x128xf32, #tpu.memory_space<vmem>>, %arg3: memref<1x128xf32, #tpu.memory_space<vmem>>, %arg4: memref<2x128xf32, #tpu.memory_space<vmem>>, %arg5: memref<8x2x128xf32, #tpu.memory_space<vmem>>, %arg6: memref<8x2x128xf32, #tpu.memory_space<vmem>>, %arg7: memref<16x256xf32, #tpu.memory_space<vmem>>) attributes {dimension_semantics = [], scalar_prefetch = 0 : i64, scratch_operands = 1 : i64, tpu.core_type = #tpu.core_type<tc>} {
    %c0 = arith.constant 0 : index
    %c0_0 = arith.constant 0 : index
    %0 = vector.load %arg0[%c0, %c0_0] : memref<2x256xf32, #tpu.memory_space<vmem>>, vector<2x256xf32>
    %cst = arith.constant 0.000000e+00 : f32
    %1 = vector.broadcast %cst : f32 to vector<2x256xf32>
    %2 = arith.subf %0, %1 : vector<2x256xf32>
    %cst_1 = arith.constant 1.000000e-01 : f32
    %3 = vector.broadcast %cst_1 : f32 to vector<2x256xf32>
    %4 = arith.mulf %3, %2 : vector<2x256xf32>
    %5 = arith.addf %1, %4 : vector<2x256xf32>
    %cst_2 = arith.constant 1.000000e+00 : f32
    %6 = vector.broadcast %cst_2 : f32 to vector<2x256xf32>
    %7 = arith.cmpf ogt, %5, %6 : vector<2x256xf32>
    %8 = arith.extui %7 : vector<2x256xi1> to vector<2x256xi32>
    %9 = arith.sitofp %8 : vector<2x256xi32> to vector<2x256xf32>
    %cst_3 = arith.constant 1.000000e+00 : f32
    %10 = vector.broadcast %cst_3 : f32 to vector<2x256xf32>
    %11 = arith.subf %10, %9 : vector<2x256xf32>
    %12 = arith.mulf %11, %5 : vector<2x256xf32>
    %c0_4 = arith.constant 0 : index
    %c0_5 = arith.constant 0 : index
    %13 = vector.load %arg7[%c0_4, %c0_5] : memref<16x256xf32, #tpu.memory_space<vmem>>, vector<2x256xf32>
    tpu.vector_store %arg7[%c0_4, %c0_5], %9 {strides = array<i32>} : memref<16x256xf32, #tpu.memory_space<vmem>>, vector<2x256xf32>,
    %14 = arith.subf %0, %12 : vector<2x256xf32>
    %cst_6 = arith.constant 1.000000e-01 : f32
    %15 = vector.broadcast %cst_6 : f32 to vector<2x256xf32>
    %16 = arith.mulf %15, %14 : vector<2x256xf32>
    %17 = arith.addf %12, %16 : vector<2x256xf32>
    %cst_7 = arith.constant 1.000000e+00 : f32
    %18 = vector.broadcast %cst_7 : f32 to vector<2x256xf32>
    %19 = arith.cmpf ogt, %17, %18 : vector<2x256xf32>
    %20 = arith.extui %19 : vector<2x256xi1> to vector<2x256xi32>
    %21 = arith.sitofp %20 : vector<2x256xi32> to vector<2x256xf32>
    %cst_8 = arith.constant 1.000000e+00 : f32
    %22 = vector.broadcast %cst_8 : f32 to vector<2x256xf32>
    %23 = arith.subf %22, %21 : vector<2x256xf32>
    %24 = arith.mulf %23, %17 : vector<2x256xf32>
    %c2 = arith.constant 2 : index
    %c0_9 = arith.constant 0 : index
    %25 = vector.load %arg7[%c2, %c0_9] : memref<16x256xf32, #tpu.memory_space<vmem>>, vector<2x256xf32>
    tpu.vector_store %arg7[%c2, %c0_9], %21 {strides = array<i32>} : memref<16x256xf32, #tpu.memory_space<vmem>>, vector<2x256xf32>,
    %26 = arith.subf %0, %24 : vector<2x256xf32>
    %cst_10 = arith.constant 1.000000e-01 : f32
    %27 = vector.broadcast %cst_10 : f32 to vector<2x256xf32>
    %28 = arith.mulf %27, %26 : vector<2x256xf32>
    %29 = arith.addf %24, %28 : vector<2x256xf32>
    %cst_11 = arith.constant 1.000000e+00 : f32
    %30 = vector.broadcast %cst_11 : f32 to vector<2x256xf32>
    %31 = arith.cmpf ogt, %29, %30 : vector<2x256xf32>
    %32 = arith.extui %31 : vector<2x256xi1> to vector<2x256xi32>
    %33 = arith.sitofp %32 : vector<2x256xi32> to vector<2x256xf32>
    %cst_12 = arith.constant 1.000000e+00 : f32
    %34 = vector.broadcast %cst_12 : f32 to vector<2x256xf32>
    %35 = arith.subf %34, %33 : vector<2x256xf32>
    %36 = arith.mulf %35, %29 : vector<2x256xf32>
    %c4 = arith.constant 4 : index
    %c0_13 = arith.constant 0 : index
    %37 = vector.load %arg7[%c4, %c0_13] : memref<16x256xf32, #tpu.memory_space<vmem>>, vector<2x256xf32>
    tpu.vector_store %arg7[%c4, %c0_13], %33 {strides = array<i32>} : memref<16x256xf32, #tpu.memory_space<vmem>>, vector<2x256xf32>,
    %38 = arith.subf %0, %36 : vector<2x256xf32>
    %cst_14 = arith.constant 1.000000e-01 : f32
    %39 = vector.broadcast %cst_14 : f32 to vector<2x256xf32>
    %40 = arith.mulf %39, %38 : vector<2x256xf32>
    %41 = arith.addf %36, %40 : vector<2x256xf32>
    %cst_15 = arith.constant 1.000000e+00 : f32
    %42 = vector.broadcast %cst_15 : f32 to vector<2x256xf32>
    %43 = arith.cmpf ogt, %41, %42 : vector<2x256xf32>
    %44 = arith.extui %43 : vector<2x256xi1> to vector<2x256xi32>
    %45 = arith.sitofp %44 : vector<2x256xi32> to vector<2x256xf32>
    %cst_16 = arith.constant 1.000000e+00 : f32
    %46 = vector.broadcast %cst_16 : f32 to vector<2x256xf32>
    %47 = arith.subf %46, %45 : vector<2x256xf32>
    %48 = arith.mulf %47, %41 : vector<2x256xf32>
    %c6 = arith.constant 6 : index
    %c0_17 = arith.constant 0 : index
    %49 = vector.load %arg7[%c6, %c0_17] : memref<16x256xf32, #tpu.memory_space<vmem>>, vector<2x256xf32>
    tpu.vector_store %arg7[%c6, %c0_17], %45 {strides = array<i32>} : memref<16x256xf32, #tpu.memory_space<vmem>>, vector<2x256xf32>,
    %50 = arith.subf %0, %48 : vector<2x256xf32>
    %cst_18 = arith.constant 1.000000e-01 : f32
    %51 = vector.broadcast %cst_18 : f32 to vector<2x256xf32>
    %52 = arith.mulf %51, %50 : vector<2x256xf32>
    %53 = arith.addf %48, %52 : vector<2x256xf32>
    %cst_19 = arith.constant 1.000000e+00 : f32
    %54 = vector.broadcast %cst_19 : f32 to vector<2x256xf32>
    %55 = arith.cmpf ogt, %53, %54 : vector<2x256xf32>
    %56 = arith.extui %55 : vector<2x256xi1> to vector<2x256xi32>
    %57 = arith.sitofp %56 : vector<2x256xi32> to vector<2x256xf32>
    %cst_20 = arith.constant 1.000000e+00 : f32
    %58 = vector.broadcast %cst_20 : f32 to vector<2x256xf32>
    %59 = arith.subf %58, %57 : vector<2x256xf32>
    %60 = arith.mulf %59, %53 : vector<2x256xf32>
    %c8 = arith.constant 8 : index
    %c0_21 = arith.constant 0 : index
    %61 = vector.load %arg7[%c8, %c0_21] : memref<16x256xf32, #tpu.memory_space<vmem>>, vector<2x256xf32>
    tpu.vector_store %arg7[%c8, %c0_21], %57 {strides = array<i32>} : memref<16x256xf32, #tpu.memory_space<vmem>>, vector<2x256xf32>,
    %62 = arith.subf %0, %60 : vector<2x256xf32>
    %cst_22 = arith.constant 1.000000e-01 : f32
    %63 = vector.broadcast %cst_22 : f32 to vector<2x256xf32>
    %64 = arith.mulf %63, %62 : vector<2x256xf32>
    %65 = arith.addf %60, %64 : vector<2x256xf32>
    %cst_23 = arith.constant 1.000000e+00 : f32
    %66 = vector.broadcast %cst_23 : f32 to vector<2x256xf32>
    %67 = arith.cmpf ogt, %65, %66 : vector<2x256xf32>
    %68 = arith.extui %67 : vector<2x256xi1> to vector<2x256xi32>
    %69 = arith.sitofp %68 : vector<2x256xi32> to vector<2x256xf32>
    %cst_24 = arith.constant 1.000000e+00 : f32
    %70 = vector.broadcast %cst_24 : f32 to vector<2x256xf32>
    %71 = arith.subf %70, %69 : vector<2x256xf32>
    %72 = arith.mulf %71, %65 : vector<2x256xf32>
    %c10 = arith.constant 10 : index
    %c0_25 = arith.constant 0 : index
    %73 = vector.load %arg7[%c10, %c0_25] : memref<16x256xf32, #tpu.memory_space<vmem>>, vector<2x256xf32>
    tpu.vector_store %arg7[%c10, %c0_25], %69 {strides = array<i32>} : memref<16x256xf32, #tpu.memory_space<vmem>>, vector<2x256xf32>,
    %74 = arith.subf %0, %72 : vector<2x256xf32>
    %cst_26 = arith.constant 1.000000e-01 : f32
    %75 = vector.broadcast %cst_26 : f32 to vector<2x256xf32>
    %76 = arith.mulf %75, %74 : vector<2x256xf32>
    %77 = arith.addf %72, %76 : vector<2x256xf32>
    %cst_27 = arith.constant 1.000000e+00 : f32
    %78 = vector.broadcast %cst_27 : f32 to vector<2x256xf32>
    %79 = arith.cmpf ogt, %77, %78 : vector<2x256xf32>
    %80 = arith.extui %79 : vector<2x256xi1> to vector<2x256xi32>
    %81 = arith.sitofp %80 : vector<2x256xi32> to vector<2x256xf32>
    %cst_28 = arith.constant 1.000000e+00 : f32
    %82 = vector.broadcast %cst_28 : f32 to vector<2x256xf32>
    %83 = arith.subf %82, %81 : vector<2x256xf32>
    %84 = arith.mulf %83, %77 : vector<2x256xf32>
    %c12 = arith.constant 12 : index
    %c0_29 = arith.constant 0 : index
    %85 = vector.load %arg7[%c12, %c0_29] : memref<16x256xf32, #tpu.memory_space<vmem>>, vector<2x256xf32>
    tpu.vector_store %arg7[%c12, %c0_29], %81 {strides = array<i32>} : memref<16x256xf32, #tpu.memory_space<vmem>>, vector<2x256xf32>,
    %86 = arith.subf %0, %84 : vector<2x256xf32>
    %cst_30 = arith.constant 1.000000e-01 : f32
    %87 = vector.broadcast %cst_30 : f32 to vector<2x256xf32>
    %88 = arith.mulf %87, %86 : vector<2x256xf32>
    %89 = arith.addf %84, %88 : vector<2x256xf32>
    %cst_31 = arith.constant 1.000000e+00 : f32
    %90 = vector.broadcast %cst_31 : f32 to vector<2x256xf32>
    %91 = arith.cmpf ogt, %89, %90 : vector<2x256xf32>
    %92 = arith.extui %91 : vector<2x256xi1> to vector<2x256xi32>
    %93 = arith.sitofp %92 : vector<2x256xi32> to vector<2x256xf32>
    %c14 = arith.constant 14 : index
    %c0_32 = arith.constant 0 : index
    %94 = vector.load %arg7[%c14, %c0_32] : memref<16x256xf32, #tpu.memory_space<vmem>>, vector<2x256xf32>
    tpu.vector_store %arg7[%c14, %c0_32], %93 {strides = array<i32>} : memref<16x256xf32, #tpu.memory_space<vmem>>, vector<2x256xf32>,
    %c0_33 = arith.constant 0 : index
    %c0_34 = arith.constant 0 : index
    %95 = vector.load %arg7[%c0_33, %c0_34] : memref<16x256xf32, #tpu.memory_space<vmem>>, vector<16x256xf32>
    %c0_35 = arith.constant 0 : index
    %c0_36 = arith.constant 0 : index
    %96 = vector.load %arg1[%c0_35, %c0_36] : memref<256x512xf32, #tpu.memory_space<vmem>>, vector<256x512xf32>
    %cst_37 = arith.constant dense<0.000000e+00> : vector<16x512xf32>
    %97 = tpu.matmul %95, %96, %cst_37 {dimension_numbers = #tpu.dot_dimension_numbers<[1], [0], [0], [1], [0, 0, 1, 1], [], []>} : vector<16x256xf32>, vector<256x512xf32>, vector<16x512xf32> -> vector<16x512xf32>
    %98 = vector.extract_strided_slice %97 {offsets = [0, 0], sizes = [16, 128], strides = [1, 1]} : vector<16x512xf32> to vector<16x128xf32>
    %99 = vector.extract_strided_slice %97 {offsets = [0, 128], sizes = [16, 128], strides = [1, 1]} : vector<16x512xf32> to vector<16x128xf32>
    %100 = arith.maximumf %98, %99 : vector<16x128xf32>
    %101 = vector.extract_strided_slice %97 {offsets = [0, 256], sizes = [16, 128], strides = [1, 1]} : vector<16x512xf32> to vector<16x128xf32>
    %102 = vector.extract_strided_slice %97 {offsets = [0, 384], sizes = [16, 128], strides = [1, 1]} : vector<16x512xf32> to vector<16x128xf32>
    %103 = arith.maximumf %101, %102 : vector<16x128xf32>
    %104 = arith.maximumf %100, %103 : vector<16x128xf32>
    %c0_38 = arith.constant 0 : index
    %c0_39 = arith.constant 0 : index
    %105 = vector.load %arg2[%c0_38, %c0_39] : memref<128x128xf32, #tpu.memory_space<vmem>>, vector<128x128xf32>
    %cst_40 = arith.constant dense<0.000000e+00> : vector<16x128xf32>
    %106 = tpu.matmul %104, %105, %cst_40 {dimension_numbers = #tpu.dot_dimension_numbers<[1], [0], [0], [1], [0, 0, 1, 1], [], []>} : vector<16x128xf32>, vector<128x128xf32>, vector<16x128xf32> -> vector<16x128xf32>
    %c0_41 = arith.constant 0 : index
    %c0_42 = arith.constant 0 : index
    %107 = vector.load %arg3[%c0_41, %c0_42] : memref<1x128xf32, #tpu.memory_space<vmem>>, vector<1x128xf32>
    %108 = vector.broadcast %107 : vector<1x128xf32> to vector<16x128xf32>
    %109 = arith.addf %106, %108 : vector<16x128xf32>
    %cst_43 = arith.constant 0.000000e+00 : f32
    %110 = vector.broadcast %cst_43 : f32 to vector<2x128xf32>
    %cst_44 = arith.constant 0.000000e+00 : f32
    %111 = vector.broadcast %cst_44 : f32 to vector<2x128xf32>
    %cst_45 = arith.constant 0.000000e+00 : f32
    %112 = vector.broadcast %cst_45 : f32 to vector<2x128xf32>
    %113 = arith.subf %111, %110 : vector<2x128xf32>
    %cst_46 = arith.constant 1.000000e-01 : f32
    %114 = vector.broadcast %cst_46 : f32 to vector<2x128xf32>
    %115 = arith.mulf %114, %113 : vector<2x128xf32>
    %116 = arith.addf %110, %115 : vector<2x128xf32>
    %cst_47 = arith.constant 2.000000e-01 : f32
    %117 = vector.broadcast %cst_47 : f32 to vector<2x128xf32>
    %118 = arith.mulf %117, %111 : vector<2x128xf32>
    %119 = arith.subf %111, %118 : vector<2x128xf32>
    %cst_48 = arith.constant 1.000000e+00 : f32
    %120 = vector.broadcast %cst_48 : f32 to vector<2x128xf32>
    %121 = arith.subf %116, %120 : vector<2x128xf32>
    %cst_49 = arith.constant 0.000000e+00 : f32
    %122 = vector.broadcast %cst_49 : f32 to vector<2x128xf32>
    %123 = arith.cmpf ogt, %121, %122 : vector<2x128xf32>
    %124 = arith.extui %123 : vector<2x128xi1> to vector<2x128xi32>
    %125 = arith.sitofp %124 : vector<2x128xi32> to vector<2x128xf32>
    %cst_50 = arith.constant 1.000000e+00 : f32
    %126 = vector.broadcast %cst_50 : f32 to vector<2x128xf32>
    %127 = arith.subf %126, %125 : vector<2x128xf32>
    %128 = arith.mulf %127, %116 : vector<2x128xf32>
    %129 = vector.extract_strided_slice %109 {offsets = [0, 0], sizes = [2, 128], strides = [1, 1]} : vector<16x128xf32> to vector<2x128xf32>
    %130 = arith.addf %119, %129 : vector<2x128xf32>
    %131 = arith.addf %112, %125 : vector<2x128xf32>
    %c0_51 = arith.constant 0 : index
    %c0_52 = arith.constant 0 : index
    %c0_53 = arith.constant 0 : index
    %132 = vector.load %arg5[%c0_51, %c0_52, %c0_53] : memref<8x2x128xf32, #tpu.memory_space<vmem>>, vector<1x2x128xf32>
    %133 = vector.shape_cast %132 : vector<1x2x128xf32> to vector<2x128xf32>
    %134 = vector.shape_cast %128 : vector<2x128xf32> to vector<1x2x128xf32>
    tpu.vector_store %arg5[%c0_51, %c0_52, %c0_53], %134 {strides = array<i32>} : memref<8x2x128xf32, #tpu.memory_space<vmem>>, vector<1x2x128xf32>,
    %c0_54 = arith.constant 0 : index
    %c0_55 = arith.constant 0 : index
    %c0_56 = arith.constant 0 : index
    %135 = vector.load %arg6[%c0_54, %c0_55, %c0_56] : memref<8x2x128xf32, #tpu.memory_space<vmem>>, vector<1x2x128xf32>
    %136 = vector.shape_cast %135 : vector<1x2x128xf32> to vector<2x128xf32>
    %137 = vector.shape_cast %125 : vector<2x128xf32> to vector<1x2x128xf32>
    tpu.vector_store %arg6[%c0_54, %c0_55, %c0_56], %137 {strides = array<i32>} : memref<8x2x128xf32, #tpu.memory_space<vmem>>, vector<1x2x128xf32>,
    %138 = arith.subf %130, %128 : vector<2x128xf32>
    %cst_57 = arith.constant 1.000000e-01 : f32
    %139 = vector.broadcast %cst_57 : f32 to vector<2x128xf32>
    %140 = arith.mulf %139, %138 : vector<2x128xf32>
    %141 = arith.addf %128, %140 : vector<2x128xf32>
    %cst_58 = arith.constant 2.000000e-01 : f32
    %142 = vector.broadcast %cst_58 : f32 to vector<2x128xf32>
    %143 = arith.mulf %142, %130 : vector<2x128xf32>
    %144 = arith.subf %130, %143 : vector<2x128xf32>
    %cst_59 = arith.constant 1.000000e+00 : f32
    %145 = vector.broadcast %cst_59 : f32 to vector<2x128xf32>
    %146 = arith.subf %141, %145 : vector<2x128xf32>
    %cst_60 = arith.constant 0.000000e+00 : f32
    %147 = vector.broadcast %cst_60 : f32 to vector<2x128xf32>
    %148 = arith.cmpf ogt, %146, %147 : vector<2x128xf32>
    %149 = arith.extui %148 : vector<2x128xi1> to vector<2x128xi32>
    %150 = arith.sitofp %149 : vector<2x128xi32> to vector<2x128xf32>
    %cst_61 = arith.constant 1.000000e+00 : f32
    %151 = vector.broadcast %cst_61 : f32 to vector<2x128xf32>
    %152 = arith.subf %151, %150 : vector<2x128xf32>
    %153 = arith.mulf %152, %141 : vector<2x128xf32>
    %154 = vector.extract_strided_slice %109 {offsets = [2, 0], sizes = [2, 128], strides = [1, 1]} : vector<16x128xf32> to vector<2x128xf32>
    %155 = arith.addf %144, %154 : vector<2x128xf32>
    %156 = arith.addf %131, %150 : vector<2x128xf32>
    %c1 = arith.constant 1 : index
    %c0_62 = arith.constant 0 : index
    %c0_63 = arith.constant 0 : index
    %157 = vector.load %arg5[%c1, %c0_62, %c0_63] : memref<8x2x128xf32, #tpu.memory_space<vmem>>, vector<1x2x128xf32>
    %158 = vector.shape_cast %157 : vector<1x2x128xf32> to vector<2x128xf32>
    %159 = vector.shape_cast %153 : vector<2x128xf32> to vector<1x2x128xf32>
    tpu.vector_store %arg5[%c1, %c0_62, %c0_63], %159 {strides = array<i32>} : memref<8x2x128xf32, #tpu.memory_space<vmem>>, vector<1x2x128xf32>,
    %c1_64 = arith.constant 1 : index
    %c0_65 = arith.constant 0 : index
    %c0_66 = arith.constant 0 : index
    %160 = vector.load %arg6[%c1_64, %c0_65, %c0_66] : memref<8x2x128xf32, #tpu.memory_space<vmem>>, vector<1x2x128xf32>
    %161 = vector.shape_cast %160 : vector<1x2x128xf32> to vector<2x128xf32>
    %162 = vector.shape_cast %150 : vector<2x128xf32> to vector<1x2x128xf32>
    tpu.vector_store %arg6[%c1_64, %c0_65, %c0_66], %162 {strides = array<i32>} : memref<8x2x128xf32, #tpu.memory_space<vmem>>, vector<1x2x128xf32>,
    %163 = arith.subf %155, %153 : vector<2x128xf32>
    %cst_67 = arith.constant 1.000000e-01 : f32
    %164 = vector.broadcast %cst_67 : f32 to vector<2x128xf32>
    %165 = arith.mulf %164, %163 : vector<2x128xf32>
    %166 = arith.addf %153, %165 : vector<2x128xf32>
    %cst_68 = arith.constant 2.000000e-01 : f32
    %167 = vector.broadcast %cst_68 : f32 to vector<2x128xf32>
    %168 = arith.mulf %167, %155 : vector<2x128xf32>
    %169 = arith.subf %155, %168 : vector<2x128xf32>
    %cst_69 = arith.constant 1.000000e+00 : f32
    %170 = vector.broadcast %cst_69 : f32 to vector<2x128xf32>
    %171 = arith.subf %166, %170 : vector<2x128xf32>
    %cst_70 = arith.constant 0.000000e+00 : f32
    %172 = vector.broadcast %cst_70 : f32 to vector<2x128xf32>
    %173 = arith.cmpf ogt, %171, %172 : vector<2x128xf32>
    %174 = arith.extui %173 : vector<2x128xi1> to vector<2x128xi32>
    %175 = arith.sitofp %174 : vector<2x128xi32> to vector<2x128xf32>
    %cst_71 = arith.constant 1.000000e+00 : f32
    %176 = vector.broadcast %cst_71 : f32 to vector<2x128xf32>
    %177 = arith.subf %176, %175 : vector<2x128xf32>
    %178 = arith.mulf %177, %166 : vector<2x128xf32>
    %179 = vector.extract_strided_slice %109 {offsets = [4, 0], sizes = [2, 128], strides = [1, 1]} : vector<16x128xf32> to vector<2x128xf32>
    %180 = arith.addf %169, %179 : vector<2x128xf32>
    %181 = arith.addf %156, %175 : vector<2x128xf32>
    %c2_72 = arith.constant 2 : index
    %c0_73 = arith.constant 0 : index
    %c0_74 = arith.constant 0 : index
    %182 = vector.load %arg5[%c2_72, %c0_73, %c0_74] : memref<8x2x128xf32, #tpu.memory_space<vmem>>, vector<1x2x128xf32>
    %183 = vector.shape_cast %182 : vector<1x2x128xf32> to vector<2x128xf32>
    %184 = vector.shape_cast %178 : vector<2x128xf32> to vector<1x2x128xf32>
    tpu.vector_store %arg5[%c2_72, %c0_73, %c0_74], %184 {strides = array<i32>} : memref<8x2x128xf32, #tpu.memory_space<vmem>>, vector<1x2x128xf32>,
    %c2_75 = arith.constant 2 : index
    %c0_76 = arith.constant 0 : index
    %c0_77 = arith.constant 0 : index
    %185 = vector.load %arg6[%c2_75, %c0_76, %c0_77] : memref<8x2x128xf32, #tpu.memory_space<vmem>>, vector<1x2x128xf32>
    %186 = vector.shape_cast %185 : vector<1x2x128xf32> to vector<2x128xf32>
    %187 = vector.shape_cast %175 : vector<2x128xf32> to vector<1x2x128xf32>
    tpu.vector_store %arg6[%c2_75, %c0_76, %c0_77], %187 {strides = array<i32>} : memref<8x2x128xf32, #tpu.memory_space<vmem>>, vector<1x2x128xf32>,
    %188 = arith.subf %180, %178 : vector<2x128xf32>
    %cst_78 = arith.constant 1.000000e-01 : f32
    %189 = vector.broadcast %cst_78 : f32 to vector<2x128xf32>
    %190 = arith.mulf %189, %188 : vector<2x128xf32>
    %191 = arith.addf %178, %190 : vector<2x128xf32>
    %cst_79 = arith.constant 2.000000e-01 : f32
    %192 = vector.broadcast %cst_79 : f32 to vector<2x128xf32>
    %193 = arith.mulf %192, %180 : vector<2x128xf32>
    %194 = arith.subf %180, %193 : vector<2x128xf32>
    %cst_80 = arith.constant 1.000000e+00 : f32
    %195 = vector.broadcast %cst_80 : f32 to vector<2x128xf32>
    %196 = arith.subf %191, %195 : vector<2x128xf32>
    %cst_81 = arith.constant 0.000000e+00 : f32
    %197 = vector.broadcast %cst_81 : f32 to vector<2x128xf32>
    %198 = arith.cmpf ogt, %196, %197 : vector<2x128xf32>
    %199 = arith.extui %198 : vector<2x128xi1> to vector<2x128xi32>
    %200 = arith.sitofp %199 : vector<2x128xi32> to vector<2x128xf32>
    %cst_82 = arith.constant 1.000000e+00 : f32
    %201 = vector.broadcast %cst_82 : f32 to vector<2x128xf32>
    %202 = arith.subf %201, %200 : vector<2x128xf32>
    %203 = arith.mulf %202, %191 : vector<2x128xf32>
    %204 = vector.extract_strided_slice %109 {offsets = [6, 0], sizes = [2, 128], strides = [1, 1]} : vector<16x128xf32> to vector<2x128xf32>
    %205 = arith.addf %194, %204 : vector<2x128xf32>
    %206 = arith.addf %181, %200 : vector<2x128xf32>
    %c3 = arith.constant 3 : index
    %c0_83 = arith.constant 0 : index
    %c0_84 = arith.constant 0 : index
    %207 = vector.load %arg5[%c3, %c0_83, %c0_84] : memref<8x2x128xf32, #tpu.memory_space<vmem>>, vector<1x2x128xf32>
    %208 = vector.shape_cast %207 : vector<1x2x128xf32> to vector<2x128xf32>
    %209 = vector.shape_cast %203 : vector<2x128xf32> to vector<1x2x128xf32>
    tpu.vector_store %arg5[%c3, %c0_83, %c0_84], %209 {strides = array<i32>} : memref<8x2x128xf32, #tpu.memory_space<vmem>>, vector<1x2x128xf32>,
    %c3_85 = arith.constant 3 : index
    %c0_86 = arith.constant 0 : index
    %c0_87 = arith.constant 0 : index
    %210 = vector.load %arg6[%c3_85, %c0_86, %c0_87] : memref<8x2x128xf32, #tpu.memory_space<vmem>>, vector<1x2x128xf32>
    %211 = vector.shape_cast %210 : vector<1x2x128xf32> to vector<2x128xf32>
    %212 = vector.shape_cast %200 : vector<2x128xf32> to vector<1x2x128xf32>
    tpu.vector_store %arg6[%c3_85, %c0_86, %c0_87], %212 {strides = array<i32>} : memref<8x2x128xf32, #tpu.memory_space<vmem>>, vector<1x2x128xf32>,
    %213 = arith.subf %205, %203 : vector<2x128xf32>
    %cst_88 = arith.constant 1.000000e-01 : f32
    %214 = vector.broadcast %cst_88 : f32 to vector<2x128xf32>
    %215 = arith.mulf %214, %213 : vector<2x128xf32>
    %216 = arith.addf %203, %215 : vector<2x128xf32>
    %cst_89 = arith.constant 2.000000e-01 : f32
    %217 = vector.broadcast %cst_89 : f32 to vector<2x128xf32>
    %218 = arith.mulf %217, %205 : vector<2x128xf32>
    %219 = arith.subf %205, %218 : vector<2x128xf32>
    %cst_90 = arith.constant 1.000000e+00 : f32
    %220 = vector.broadcast %cst_90 : f32 to vector<2x128xf32>
    %221 = arith.subf %216, %220 : vector<2x128xf32>
    %cst_91 = arith.constant 0.000000e+00 : f32
    %222 = vector.broadcast %cst_91 : f32 to vector<2x128xf32>
    %223 = arith.cmpf ogt, %221, %222 : vector<2x128xf32>
    %224 = arith.extui %223 : vector<2x128xi1> to vector<2x128xi32>
    %225 = arith.sitofp %224 : vector<2x128xi32> to vector<2x128xf32>
    %cst_92 = arith.constant 1.000000e+00 : f32
    %226 = vector.broadcast %cst_92 : f32 to vector<2x128xf32>
    %227 = arith.subf %226, %225 : vector<2x128xf32>
    %228 = arith.mulf %227, %216 : vector<2x128xf32>
    %229 = vector.extract_strided_slice %109 {offsets = [8, 0], sizes = [2, 128], strides = [1, 1]} : vector<16x128xf32> to vector<2x128xf32>
    %230 = arith.addf %219, %229 : vector<2x128xf32>
    %231 = arith.addf %206, %225 : vector<2x128xf32>
    %c4_93 = arith.constant 4 : index
    %c0_94 = arith.constant 0 : index
    %c0_95 = arith.constant 0 : index
    %232 = vector.load %arg5[%c4_93, %c0_94, %c0_95] : memref<8x2x128xf32, #tpu.memory_space<vmem>>, vector<1x2x128xf32>
    %233 = vector.shape_cast %232 : vector<1x2x128xf32> to vector<2x128xf32>
    %234 = vector.shape_cast %228 : vector<2x128xf32> to vector<1x2x128xf32>
    tpu.vector_store %arg5[%c4_93, %c0_94, %c0_95], %234 {strides = array<i32>} : memref<8x2x128xf32, #tpu.memory_space<vmem>>, vector<1x2x128xf32>,
    %c4_96 = arith.constant 4 : index
    %c0_97 = arith.constant 0 : index
    %c0_98 = arith.constant 0 : index
    %235 = vector.load %arg6[%c4_96, %c0_97, %c0_98] : memref<8x2x128xf32, #tpu.memory_space<vmem>>, vector<1x2x128xf32>
    %236 = vector.shape_cast %235 : vector<1x2x128xf32> to vector<2x128xf32>
    %237 = vector.shape_cast %225 : vector<2x128xf32> to vector<1x2x128xf32>
    tpu.vector_store %arg6[%c4_96, %c0_97, %c0_98], %237 {strides = array<i32>} : memref<8x2x128xf32, #tpu.memory_space<vmem>>, vector<1x2x128xf32>,
    %238 = arith.subf %230, %228 : vector<2x128xf32>
    %cst_99 = arith.constant 1.000000e-01 : f32
    %239 = vector.broadcast %cst_99 : f32 to vector<2x128xf32>
    %240 = arith.mulf %239, %238 : vector<2x128xf32>
    %241 = arith.addf %228, %240 : vector<2x128xf32>
    %cst_100 = arith.constant 2.000000e-01 : f32
    %242 = vector.broadcast %cst_100 : f32 to vector<2x128xf32>
    %243 = arith.mulf %242, %230 : vector<2x128xf32>
    %244 = arith.subf %230, %243 : vector<2x128xf32>
    %cst_101 = arith.constant 1.000000e+00 : f32
    %245 = vector.broadcast %cst_101 : f32 to vector<2x128xf32>
    %246 = arith.subf %241, %245 : vector<2x128xf32>
    %cst_102 = arith.constant 0.000000e+00 : f32
    %247 = vector.broadcast %cst_102 : f32 to vector<2x128xf32>
    %248 = arith.cmpf ogt, %246, %247 : vector<2x128xf32>
    %249 = arith.extui %248 : vector<2x128xi1> to vector<2x128xi32>
    %250 = arith.sitofp %249 : vector<2x128xi32> to vector<2x128xf32>
    %cst_103 = arith.constant 1.000000e+00 : f32
    %251 = vector.broadcast %cst_103 : f32 to vector<2x128xf32>
    %252 = arith.subf %251, %250 : vector<2x128xf32>
    %253 = arith.mulf %252, %241 : vector<2x128xf32>
    %254 = vector.extract_strided_slice %109 {offsets = [10, 0], sizes = [2, 128], strides = [1, 1]} : vector<16x128xf32> to vector<2x128xf32>
    %255 = arith.addf %244, %254 : vector<2x128xf32>
    %256 = arith.addf %231, %250 : vector<2x128xf32>
    %c5 = arith.constant 5 : index
    %c0_104 = arith.constant 0 : index
    %c0_105 = arith.constant 0 : index
    %257 = vector.load %arg5[%c5, %c0_104, %c0_105] : memref<8x2x128xf32, #tpu.memory_space<vmem>>, vector<1x2x128xf32>
    %258 = vector.shape_cast %257 : vector<1x2x128xf32> to vector<2x128xf32>
    %259 = vector.shape_cast %253 : vector<2x128xf32> to vector<1x2x128xf32>
    tpu.vector_store %arg5[%c5, %c0_104, %c0_105], %259 {strides = array<i32>} : memref<8x2x128xf32, #tpu.memory_space<vmem>>, vector<1x2x128xf32>,
    %c5_106 = arith.constant 5 : index
    %c0_107 = arith.constant 0 : index
    %c0_108 = arith.constant 0 : index
    %260 = vector.load %arg6[%c5_106, %c0_107, %c0_108] : memref<8x2x128xf32, #tpu.memory_space<vmem>>, vector<1x2x128xf32>
    %261 = vector.shape_cast %260 : vector<1x2x128xf32> to vector<2x128xf32>
    %262 = vector.shape_cast %250 : vector<2x128xf32> to vector<1x2x128xf32>
    tpu.vector_store %arg6[%c5_106, %c0_107, %c0_108], %262 {strides = array<i32>} : memref<8x2x128xf32, #tpu.memory_space<vmem>>, vector<1x2x128xf32>,
    %263 = arith.subf %255, %253 : vector<2x128xf32>
    %cst_109 = arith.constant 1.000000e-01 : f32
    %264 = vector.broadcast %cst_109 : f32 to vector<2x128xf32>
    %265 = arith.mulf %264, %263 : vector<2x128xf32>
    %266 = arith.addf %253, %265 : vector<2x128xf32>
    %cst_110 = arith.constant 2.000000e-01 : f32
    %267 = vector.broadcast %cst_110 : f32 to vector<2x128xf32>
    %268 = arith.mulf %267, %255 : vector<2x128xf32>
    %269 = arith.subf %255, %268 : vector<2x128xf32>
    %cst_111 = arith.constant 1.000000e+00 : f32
    %270 = vector.broadcast %cst_111 : f32 to vector<2x128xf32>
    %271 = arith.subf %266, %270 : vector<2x128xf32>
    %cst_112 = arith.constant 0.000000e+00 : f32
    %272 = vector.broadcast %cst_112 : f32 to vector<2x128xf32>
    %273 = arith.cmpf ogt, %271, %272 : vector<2x128xf32>
    %274 = arith.extui %273 : vector<2x128xi1> to vector<2x128xi32>
    %275 = arith.sitofp %274 : vector<2x128xi32> to vector<2x128xf32>
    %cst_113 = arith.constant 1.000000e+00 : f32
    %276 = vector.broadcast %cst_113 : f32 to vector<2x128xf32>
    %277 = arith.subf %276, %275 : vector<2x128xf32>
    %278 = arith.mulf %277, %266 : vector<2x128xf32>
    %279 = vector.extract_strided_slice %109 {offsets = [12, 0], sizes = [2, 128], strides = [1, 1]} : vector<16x128xf32> to vector<2x128xf32>
    %280 = arith.addf %269, %279 : vector<2x128xf32>
    %281 = arith.addf %256, %275 : vector<2x128xf32>
    %c6_114 = arith.constant 6 : index
    %c0_115 = arith.constant 0 : index
    %c0_116 = arith.constant 0 : index
    %282 = vector.load %arg5[%c6_114, %c0_115, %c0_116] : memref<8x2x128xf32, #tpu.memory_space<vmem>>, vector<1x2x128xf32>
    %283 = vector.shape_cast %282 : vector<1x2x128xf32> to vector<2x128xf32>
    %284 = vector.shape_cast %278 : vector<2x128xf32> to vector<1x2x128xf32>
    tpu.vector_store %arg5[%c6_114, %c0_115, %c0_116], %284 {strides = array<i32>} : memref<8x2x128xf32, #tpu.memory_space<vmem>>, vector<1x2x128xf32>,
    %c6_117 = arith.constant 6 : index
    %c0_118 = arith.constant 0 : index
    %c0_119 = arith.constant 0 : index
    %285 = vector.load %arg6[%c6_117, %c0_118, %c0_119] : memref<8x2x128xf32, #tpu.memory_space<vmem>>, vector<1x2x128xf32>
    %286 = vector.shape_cast %285 : vector<1x2x128xf32> to vector<2x128xf32>
    %287 = vector.shape_cast %275 : vector<2x128xf32> to vector<1x2x128xf32>
    tpu.vector_store %arg6[%c6_117, %c0_118, %c0_119], %287 {strides = array<i32>} : memref<8x2x128xf32, #tpu.memory_space<vmem>>, vector<1x2x128xf32>,
    %288 = arith.subf %280, %278 : vector<2x128xf32>
    %cst_120 = arith.constant 1.000000e-01 : f32
    %289 = vector.broadcast %cst_120 : f32 to vector<2x128xf32>
    %290 = arith.mulf %289, %288 : vector<2x128xf32>
    %291 = arith.addf %278, %290 : vector<2x128xf32>
    %cst_121 = arith.constant 1.000000e+00 : f32
    %292 = vector.broadcast %cst_121 : f32 to vector<2x128xf32>
    %293 = arith.subf %291, %292 : vector<2x128xf32>
    %cst_122 = arith.constant 0.000000e+00 : f32
    %294 = vector.broadcast %cst_122 : f32 to vector<2x128xf32>
    %295 = arith.cmpf ogt, %293, %294 : vector<2x128xf32>
    %296 = arith.extui %295 : vector<2x128xi1> to vector<2x128xi32>
    %297 = arith.sitofp %296 : vector<2x128xi32> to vector<2x128xf32>
    %cst_123 = arith.constant 1.000000e+00 : f32
    %298 = vector.broadcast %cst_123 : f32 to vector<2x128xf32>
    %299 = arith.subf %298, %297 : vector<2x128xf32>
    %300 = arith.mulf %299, %291 : vector<2x128xf32>
    %301 = arith.addf %281, %297 : vector<2x128xf32>
    %c7 = arith.constant 7 : index
    %c0_124 = arith.constant 0 : index
    %c0_125 = arith.constant 0 : index
    %302 = vector.load %arg5[%c7, %c0_124, %c0_125] : memref<8x2x128xf32, #tpu.memory_space<vmem>>, vector<1x2x128xf32>
    %303 = vector.shape_cast %302 : vector<1x2x128xf32> to vector<2x128xf32>
    %304 = vector.shape_cast %300 : vector<2x128xf32> to vector<1x2x128xf32>
    tpu.vector_store %arg5[%c7, %c0_124, %c0_125], %304 {strides = array<i32>} : memref<8x2x128xf32, #tpu.memory_space<vmem>>, vector<1x2x128xf32>,
    %c7_126 = arith.constant 7 : index
    %c0_127 = arith.constant 0 : index
    %c0_128 = arith.constant 0 : index
    %305 = vector.load %arg6[%c7_126, %c0_127, %c0_128] : memref<8x2x128xf32, #tpu.memory_space<vmem>>, vector<1x2x128xf32>
    %306 = vector.shape_cast %305 : vector<1x2x128xf32> to vector<2x128xf32>
    %307 = vector.shape_cast %297 : vector<2x128xf32> to vector<1x2x128xf32>
    tpu.vector_store %arg6[%c7_126, %c0_127, %c0_128], %307 {strides = array<i32>} : memref<8x2x128xf32, #tpu.memory_space<vmem>>, vector<1x2x128xf32>,
    %c0_129 = arith.constant 0 : index
    %c0_130 = arith.constant 0 : index
    %308 = vector.load %arg4[%c0_129, %c0_130] : memref<2x128xf32, #tpu.memory_space<vmem>>, vector<2x128xf32>
    tpu.vector_store %arg4[%c0_129, %c0_130], %301 {strides = array<i32>} : memref<2x128xf32, #tpu.memory_space<vmem>>, vector<2x128xf32>,
    return
  }
}

</mosaic_0001>

<llo_original>
// kernel: tpu_custom_call.1
$region0: #{tpu_custom_call.1}
  #allocation0 [shape = 'u32[]', space=smem, size = 0x4, offset = 0x4, fixed_abs, tag = 'smem constant byte address 0x4 - core index']
  #allocation1 [shape = 'u32[144,128]{1,0:T(1,128)}', space=vmem, size = 0x12000, scoped, tag = 'internal scratch']
  #allocation2 [shape = 'f32[16,256]{1,0:T(8,128)}', space=vmem, size = 0x4000, scoped, tag = 'scratch operand']
  %s0 = inlined_call_operand.hbm [shape: f32[2,256], index: 0, kind: input, shape index: {}]
  %s1 = inlined_call_operand.hbm [shape: f32[256,512], index: 1, kind: input, shape index: {}]
  %s2 = inlined_call_operand.hbm [shape: f32[128,128], index: 2, kind: input, shape index: {}]
  %s3 = inlined_call_operand.vmem [shape: f32[1,128], index: 3, kind: input, shape index: {}]
  %s4 = inlined_call_operand.hbm [shape: f32[2,128], index: 4, kind: output, shape index: {0}]
  %s5 = inlined_call_operand.hbm [shape: f32[8,2,128], index: 5, kind: output, shape index: {1}]
  %s6 = inlined_call_operand.hbm [shape: f32[8,2,128], index: 6, kind: output, shape index: {2}]
  %7 = xla_tuple %s4, %s5, %s6
  %s8 = sld [smem:[#allocation0]]
  $region54: #{tpu_custom_call.1} parent=0
    _
  %s10 = ssub.s32 1, %s8
  %s11 = scalar_select 0, %s10, %s8
  $region1: #{tpu_custom_call.1} parent=0
    #allocation3 [shape = 'u8[2048]{0}', space=vmem, size = 0x800, scoped, tag = 'input window, operand 0, single buffered']
    #allocation4 [shape = 's32[1]{0}', space=sflag, size = 0x4, scoped, tag = 'scoped memory for tpu_custom_call.1']
    #allocation5 [shape = 's32[1]{0}', space=sflag, size = 0x4, scoped, tag = 'scoped memory for tpu_custom_call.1']
    #allocation6 [shape = 'u8[524288]{0}', space=vmem, size = 0x80000, scoped, tag = 'input window, operand 1, single buffered']
    #allocation7 [shape = 's32[1]{0}', space=sflag, size = 0x4, scoped, tag = 'scoped memory for tpu_custom_call.1']
    #allocation8 [shape = 'u8[65536]{0}', space=vmem, size = 0x10000, scoped, tag = 'input window, operand 2, single buffered']
    #allocation9 [shape = 'u8[1024]{0}', space=vmem, size = 0x400, scoped, tag = 'output window, operand 0, single buffered']
    #allocation10 [shape = 'u8[8192]{0}', space=vmem, size = 0x2000, scoped, tag = 'output window, operand 1, single buffered']
    #allocation11 [shape = 's32[1]{0}', space=sflag, size = 0x4, scoped, tag = 'scoped memory for tpu_custom_call.1']
    #allocation12 [shape = 'u8[8192]{0}', space=vmem, size = 0x2000, scoped, tag = 'output window, operand 2, single buffered']
    %12 = vsyncpa [#allocation4], 0
    %13 = vsyncpa [#allocation7], 0
    %14 = vsyncpa [#allocation5], 0
    %15 = vsyncpa [#allocation11], 0
    // Predicated region
    $region2: #{tpu_custom_call.1} parent=1 // pred_check
      _
    $region3: #{tpu_custom_call.1} parent=1 // pred_check_branch
      %17 = sbr.rel (0) target = $region5
    $region4: #{tpu_custom_call.1} parent=1 // pred_region
      %s19 = ssub.s32 64, 64
      %20 = vsyncadd [#allocation4], %s19
      %s22 = sshll.u32 [#allocation3], 4
      %s23 = int_to_ptr.vmem [resolvable:$true] %s22
      %25 = dma.hbm_to_vmem [thread:$0]  %s0, 64, %s23, [#allocation4]
    $region5: #{tpu_custom_call.1} parent=1 // pred_fallthru
      _
    // Predicated region
    $region6: #{tpu_custom_call.1} parent=1 // pred_check
      _
    $region7: #{tpu_custom_call.1} parent=1 // pred_check_branch
      %27 = sbr.rel (0) target = $region9
    $region8: #{tpu_custom_call.1} parent=1 // pred_region
      %s29 = ssub.s32 16384, 16384
      %30 = vsyncadd [#allocation7], %s29
      %s31 = sshll.u32 [#allocation6], 4
      %s32 = int_to_ptr.vmem [resolvable:$true] %s31
      %37 = dma.hbm_to_vmem [thread:$0]  %s1, 16384, %s32, [#allocation7], 512, 512, 32
    $region9: #{tpu_custom_call.1} parent=1 // pred_fallthru
      _
    // Predicated region
    $region10: #{tpu_custom_call.1} parent=1 // pred_check
      _
    $region11: #{tpu_custom_call.1} parent=1 // pred_check_branch
      %39 = sbr.rel (0) target = $region13
    $region12: #{tpu_custom_call.1} parent=1 // pred_region
      %s41 = ssub.s32 2048, 2048
      %42 = vsyncadd [#allocation7], %s41
      %s43 = sshll.u32 [#allocation8], 4
      %s44 = int_to_ptr.vmem [resolvable:$true] %s43
      %49 = dma.hbm_to_vmem [thread:$0]  %s2, 2048, %s44, [#allocation7], 128, 128, 8
    $region13: #{tpu_custom_call.1} parent=1 // pred_fallthru
      _
    // Predicated region
    $region14: #{tpu_custom_call.1} parent=1 // pred_check
      _
    $region15: #{tpu_custom_call.1} parent=1 // pred_check_branch
      %51 = sbr.rel (0) target = $region17
    $region16: #{tpu_custom_call.1} parent=1 // pred_region
      _
    $region17: #{tpu_custom_call.1} parent=1 // pred_fallthru
      _
    // Predicated region
    $region18: #{tpu_custom_call.1} parent=1 // pred_check
      _
    $region19: #{tpu_custom_call.1} parent=1 // pred_check_branch
      %53 = sbr.rel (0) target = $region21
    $region20: #{tpu_custom_call.1} parent=1 // pred_region
      %54 = dma.done [#allocation4], 64
    $region21: #{tpu_custom_call.1} parent=1 // pred_fallthru
      _
    // Predicated region
    $region22: #{tpu_custom_call.1} parent=1 // pred_check
      _
    $region23: #{tpu_custom_call.1} parent=1 // pred_check_branch
      %56 = sbr.rel (0) target = $region25
    $region24: #{tpu_custom_call.1} parent=1 // pred_region
      %57 = dma.done [#allocation7], 16384
    $region25: #{tpu_custom_call.1} parent=1 // pred_fallthru
      _
    // Predicated region
    $region26: #{tpu_custom_call.1} parent=1 // pred_check
      _
    $region27: #{tpu_custom_call.1} parent=1 // pred_check_branch
      %59 = sbr.rel (0) target = $region29
    $region28: #{tpu_custom_call.1} parent=1 // pred_region
      %60 = dma.done [#allocation7], 2048
    $region29: #{tpu_custom_call.1} parent=1 // pred_fallthru
      _
    %v61 = vld [vmem:[#allocation3] sm:$0xf]
    %v62 = vmul.f32 %v61, 0.1
    %v63 = vadd.f32 %v62, 0.0
    %vm64 = vcmp.gt.f32.partialorder %v63, 1.0
    %v65 = vsel %vm64, 1, 0
    %v66 = vcvt.s32.f32 %v65
    %v67 = vsub.f32 1.0, %v66
    %v68 = vmul.f32 %v67, %v63
    %v71 = vunpack.c.l.s4 1983009808
    %v72 = vunpack.c.0.s8 %v71
    %v73 = vlaneseq
    %v74 = vshrl.u32 %v73, 7
    %v75 = vsub.s32 %v72, %v74
    %v76 = vrot.slane %v66, %v75
    %v77 = vcombine.high %v76, %v76
    %80 = vst [vmem:[#allocation2] sm:$0x3] %v76
    %81 = vst [vmem:[#allocation2 + $0x8] sm:$0x3] %v77
    %v82 = vsub.f32 %v61, %v68
    %v83 = vmul.f32 %v82, 0.1
    %v84 = vadd.f32 %v68, %v83
    %vm85 = vcmp.gt.f32.partialorder %v84, 1.0
    %v86 = vsel %vm85, 1, 0
    %v87 = vcvt.s32.f32 %v86
    %v88 = vsub.f32 1.0, %v87
    %v89 = vmul.f32 %v88, %v84
    %v91 = vcombine.low %v87, %v87
    %v93 = vunpack.c.l.s4 1983009808
    %v94 = vunpack.c.0.s8 %v93
    %v95 = vlaneseq
    %v96 = vshrl.u32 %v95, 7
    %v97 = vsub.s32 %v94, %v96
    %v98 = vrot.slane %v91, %v97
    %v99 = vcombine.high %v98, %v98
    %102 = vst [vmem:[#allocation2] sm:$0xc] %v98
    %103 = vst [vmem:[#allocation2 + $0x8] sm:$0xc] %v99
    %v104 = vsub.f32 %v61, %v89
    %v105 = vmul.f32 %v104, 0.1
    %v106 = vadd.f32 %v89, %v105
    %vm107 = vcmp.gt.f32.partialorder %v106, 1.0
    %v108 = vsel %vm107, 1, 0
    %v109 = vcvt.s32.f32 %v108
    %v110 = vsub.f32 1.0, %v109
    %v111 = vmul.f32 %v110, %v106
    %v114 = vunpack.c.l.s4 1983009808
    %v115 = vunpack.c.0.s8 %v114
    %v116 = vlaneseq
    %v117 = vshrl.u32 %v116, 7
    %v118 = vsub.s32 %v115, %v117
    %v119 = vrot.slane %v109, %v118
    %v120 = vcombine.low %v119, %v119
    %123 = vst [vmem:[#allocation2] sm:$0x30] %v120
    %124 = vst [vmem:[#allocation2 + $0x8] sm:$0x30] %v119
    %v125 = vsub.f32 %v61, %v111
    %v126 = vmul.f32 %v125, 0.1
    %v127 = vadd.f32 %v111, %v126
    %vm128 = vcmp.gt.f32.partialorder %v127, 1.0
    %v129 = vsel %vm128, 1, 0
    %v130 = vcvt.s32.f32 %v129
    %v131 = vsub.f32 1.0, %v130
    %v132 = vmul.f32 %v131, %v127
    %v134 = vcombine.low %v130, %v130
    %v136 = vunpack.c.l.s4 1983009808
    %v137 = vunpack.c.0.s8 %v136
    %v138 = vlaneseq
    %v139 = vshrl.u32 %v138, 7
    %v140 = vsub.s32 %v137, %v139
    %v141 = vrot.slane %v134, %v140
    %v142 = vcombine.low %v141, %v141
    %145 = vst [vmem:[#allocation2] sm:$0xc0] %v142
    %146 = vst [vmem:[#allocation2 + $0x8] sm:$0xc0] %v141
    %v147 = vsub.f32 %v61, %v132
    %v148 = vmul.f32 %v147, 0.1
    %v149 = vadd.f32 %v132, %v148
    %vm150 = vcmp.gt.f32.partialorder %v149, 1.0
    %v151 = vsel %vm150, 1, 0
    %v152 = vcvt.s32.f32 %v151
    %v153 = vsub.f32 1.0, %v152
    %v154 = vmul.f32 %v153, %v149
    %v157 = vunpack.c.l.s4 1983009808
    %v158 = vunpack.c.0.s8 %v157
    %v159 = vlaneseq
    %v160 = vshrl.u32 %v159, 7
    %v161 = vsub.s32 %v158, %v160
    %v162 = vrot.slane %v152, %v161
    %v163 = vcombine.high %v162, %v162
    %166 = vst [vmem:[#allocation2 + $0x10] sm:$0x3] %v162
    %167 = vst [vmem:[#allocation2 + $0x18] sm:$0x3] %v163
    %v168 = vsub.f32 %v61, %v154
    %v169 = vmul.f32 %v168, 0.1
    %v170 = vadd.f32 %v154, %v169
    %vm171 = vcmp.gt.f32.partialorder %v170, 1.0
    %v172 = vsel %vm171, 1, 0
    %v173 = vcvt.s32.f32 %v172
    %v174 = vsub.f32 1.0, %v173
    %v175 = vmul.f32 %v174, %v170
    %v177 = vcombine.low %v173, %v173
    %v179 = vunpack.c.l.s4 1983009808
    %v180 = vunpack.c.0.s8 %v179
    %v181 = vlaneseq
    %v182 = vshrl.u32 %v181, 7
    %v183 = vsub.s32 %v180, %v182
    %v184 = vrot.slane %v177, %v183
    %v185 = vcombine.high %v184, %v184
    %188 = vst [vmem:[#allocation2 + $0x10] sm:$0xc] %v184
    %189 = vst [vmem:[#allocation2 + $0x18] sm:$0xc] %v185
    %v190 = vsub.f32 %v61, %v175
    %v191 = vmul.f32 %v190, 0.1
    %v192 = vadd.f32 %v175, %v191
    %vm193 = vcmp.gt.f32.partialorder %v192, 1.0
    %v194 = vsel %vm193, 1, 0
    %v195 = vcvt.s32.f32 %v194
    %v196 = vsub.f32 1.0, %v195
    %v197 = vmul.f32 %v196, %v192
    %v200 = vunpack.c.l.s4 1983009808
    %v201 = vunpack.c.0.s8 %v200
    %v202 = vlaneseq
    %v203 = vshrl.u32 %v202, 7
    %v204 = vsub.s32 %v201, %v203
    %v205 = vrot.slane %v195, %v204
    %v206 = vcombine.low %v205, %v205
    %209 = vst [vmem:[#allocation2 + $0x10] sm:$0x30] %v206
    %210 = vst [vmem:[#allocation2 + $0x18] sm:$0x30] %v205
    %v211 = vsub.f32 %v61, %v197
    %v212 = vmul.f32 %v211, 0.1
    %v213 = vadd.f32 %v197, %v212
    %vm214 = vcmp.gt.f32.partialorder %v213, 1.0
    %v215 = vsel %vm214, 1, 0
    %v216 = vcvt.s32.f32 %v215
    %v218 = vcombine.low %v216, %v216
    %v220 = vunpack.c.l.s4 1983009808
    %v221 = vunpack.c.0.s8 %v220
    %v222 = vlaneseq
    %v223 = vshrl.u32 %v222, 7
    %v224 = vsub.s32 %v221, %v223
    %v225 = vrot.slane %v218, %v224
    %v226 = vcombine.low %v225, %v225
    %229 = vst [vmem:[#allocation2 + $0x10] sm:$0xc0] %v226
    %230 = vst [vmem:[#allocation2 + $0x18] sm:$0xc0] %v225
    %v231 = vld [vmem:[#allocation2] sm:$0xff]
    %v232 = vld [vmem:[#allocation2 + $0x8] sm:$0xff]
    %v233 = vld [vmem:[#allocation2 + $0x10] sm:$0xff]
    %v234 = vld [vmem:[#allocation2 + $0x18] sm:$0xff]
    %v235 = vld [vmem:[#allocation6] sm:$0xff]
    %v236 = vld [vmem:[#allocation6 + $0x8] sm:$0xff]
    %v237 = vld [vmem:[#allocation6 + $0x10] sm:$0xff]
    %v238 = vld [vmem:[#allocation6 + $0x18] sm:$0xff]
    %v239 = vld [vmem:[#allocation6 + $0x20] sm:$0xff]
    %v240 = vld [vmem:[#allocation6 + $0x28] sm:$0xff]
    %v241 = vld [vmem:[#allocation6 + $0x30] sm:$0xff]
    %v242 = vld [vmem:[#allocation6 + $0x38] sm:$0xff]
    %v243 = vld [vmem:[#allocation6 + $0x40] sm:$0xff]
    %v244 = vld [vmem:[#allocation6 + $0x48] sm:$0xff]
    %v245 = vld [vmem:[#allocation6 + $0x50] sm:$0xff]
    %v246 = vld [vmem:[#allocation6 + $0x58] sm:$0xff]
    %v247 = vld [vmem:[#allocation6 + $0x60] sm:$0xff]
    %v248 = vld [vmem:[#allocation6 + $0x68] sm:$0xff]
    %v249 = vld [vmem:[#allocation6 + $0x70] sm:$0xff]
    %v250 = vld [vmem:[#allocation6 + $0x78] sm:$0xff]
    %v251 = vld [vmem:[#allocation6 + $0x80] sm:$0xff]
    %v252 = vld [vmem:[#allocation6 + $0x88] sm:$0xff]
    %v253 = vld [vmem:[#allocation6 + $0x90] sm:$0xff]
    %v254 = vld [vmem:[#allocation6 + $0x98] sm:$0xff]
    %v255 = vld [vmem:[#allocation6 + $0xa0] sm:$0xff]
    %v256 = vld [vmem:[#allocation6 + $0xa8] sm:$0xff]
    %v257 = vld [vmem:[#allocation6 + $0xb0] sm:$0xff]
    %v258 = vld [vmem:[#allocation6 + $0xb8] sm:$0xff]
    %v259 = vld [vmem:[#allocation6 + $0xc0] sm:$0xff]
    %v260 = vld [vmem:[#allocation6 + $0xc8] sm:$0xff]
    %v261 = vld [vmem:[#allocation6 + $0xd0] sm:$0xff]
    %v262 = vld [vmem:[#allocation6 + $0xd8] sm:$0xff]
    %v263 = vld [vmem:[#allocation6 + $0xe0] sm:$0xff]
    %v264 = vld [vmem:[#allocation6 + $0xe8] sm:$0xff]
    %v265 = vld [vmem:[#allocation6 + $0xf0] sm:$0xff]
    %v266 = vld [vmem:[#allocation6 + $0xf8] sm:$0xff]
    %v267 = vld [vmem:[#allocation6 + $0x100] sm:$0xff]
    %v268 = vld [vmem:[#allocation6 + $0x108] sm:$0xff]
    %v269 = vld [vmem:[#allocation6 + $0x110] sm:$0xff]
    %v270 = vld [vmem:[#allocation6 + $0x118] sm:$0xff]
    %v271 = vld [vmem:[#allocation6 + $0x120] sm:$0xff]
    %v272 = vld [vmem:[#allocation6 + $0x128] sm:$0xff]
    %v273 = vld [vmem:[#allocation6 + $0x130] sm:$0xff]
    %v274 = vld [vmem:[#allocation6 + $0x138] sm:$0xff]
    %v275 = vld [vmem:[#allocation6 + $0x140] sm:$0xff]
    %v276 = vld [vmem:[#allocation6 + $0x148] sm:$0xff]
    %v277 = vld [vmem:[#allocation6 + $0x150] sm:$0xff]
    %v278 = vld [vmem:[#allocation6 + $0x158] sm:$0xff]
    %v279 = vld [vmem:[#allocation6 + $0x160] sm:$0xff]
    %v280 = vld [vmem:[#allocation6 + $0x168] sm:$0xff]
    %v281 = vld [vmem:[#allocation6 + $0x170] sm:$0xff]
    %v282 = vld [vmem:[#allocation6 + $0x178] sm:$0xff]
    %v283 = vld [vmem:[#allocation6 + $0x180] sm:$0xff]
    %v284 = vld [vmem:[#allocation6 + $0x188] sm:$0xff]
    %v285 = vld [vmem:[#allocation6 + $0x190] sm:$0xff]
    %v286 = vld [vmem:[#allocation6 + $0x198] sm:$0xff]
    %v287 = vld [vmem:[#allocation6 + $0x1a0] sm:$0xff]
    %v288 = vld [vmem:[#allocation6 + $0x1a8] sm:$0xff]
    %v289 = vld [vmem:[#allocation6 + $0x1b0] sm:$0xff]
    %v290 = vld [vmem:[#allocation6 + $0x1b8] sm:$0xff]
    %v291 = vld [vmem:[#allocation6 + $0x1c0] sm:$0xff]
    %v292 = vld [vmem:[#allocation6 + $0x1c8] sm:$0xff]
    %v293 = vld [vmem:[#allocation6 + $0x1d0] sm:$0xff]
    %v294 = vld [vmem:[#allocation6 + $0x1d8] sm:$0xff]
    %v295 = vld [vmem:[#allocation6 + $0x1e0] sm:$0xff]
    %v296 = vld [vmem:[#allocation6 + $0x1e8] sm:$0xff]
    %v297 = vld [vmem:[#allocation6 + $0x1f0] sm:$0xff]
    %v298 = vld [vmem:[#allocation6 + $0x1f8] sm:$0xff]
    %v299 = vld [vmem:[#allocation6 + $0x200] sm:$0xff]
    %v300 = vld [vmem:[#allocation6 + $0x208] sm:$0xff]
    %v301 = vld [vmem:[#allocation6 + $0x210] sm:$0xff]
    %v302 = vld [vmem:[#allocation6 + $0x218] sm:$0xff]
    %v303 = vld [vmem:[#allocation6 + $0x220] sm:$0xff]
    %v304 = vld [vmem:[#allocation6 + $0x228] sm:$0xff]
    %v305 = vld [vmem:[#allocation6 + $0x230] sm:$0xff]
    %v306 = vld [vmem:[#allocation6 + $0x238] sm:$0xff]
    %v307 = vld [vmem:[#allocation6 + $0x240] sm:$0xff]
    %v308 = vld [vmem:[#allocation6 + $0x248] sm:$0xff]
    %v309 = vld [vmem:[#allocation6 + $0x250] sm:$0xff]
    %v310 = vld [vmem:[#allocation6 + $0x258] sm:$0xff]
    %v311 = vld [vmem:[#allocation6 + $0x260] sm:$0xff]
    %v312 = vld [vmem:[#allocation6 + $0x268] sm:$0xff]
    %v313 = vld [vmem:[#allocation6 + $0x270] sm:$0xff]
    %v314 = vld [vmem:[#allocation6 + $0x278] sm:$0xff]
    %v315 = vld [vmem:[#allocation6 + $0x280] sm:$0xff]
    %v316 = vld [vmem:[#allocation6 + $0x288] sm:$0xff]
    %v317 = vld [vmem:[#allocation6 + $0x290] sm:$0xff]
    %v318 = vld [vmem:[#allocation6 + $0x298] sm:$0xff]
    %v319 = vld [vmem:[#allocation6 + $0x2a0] sm:$0xff]
    %v320 = vld [vmem:[#allocation6 + $0x2a8] sm:$0xff]
    %v321 = vld [vmem:[#allocation6 + $0x2b0] sm:$0xff]
    %v322 = vld [vmem:[#allocation6 + $0x2b8] sm:$0xff]
    %v323 = vld [vmem:[#allocation6 + $0x2c0] sm:$0xff]
    %v324 = vld [vmem:[#allocation6 + $0x2c8] sm:$0xff]
    %v325 = vld [vmem:[#allocation6 + $0x2d0] sm:$0xff]
    %v326 = vld [vmem:[#allocation6 + $0x2d8] sm:$0xff]
    %v327 = vld [vmem:[#allocation6 + $0x2e0] sm:$0xff]
    %v328 = vld [vmem:[#allocation6 + $0x2e8] sm:$0xff]
    %v329 = vld [vmem:[#allocation6 + $0x2f0] sm:$0xff]
    %v330 = vld [vmem:[#allocation6 + $0x2f8] sm:$0xff]
    %v331 = vld [vmem:[#allocation6 + $0x300] sm:$0xff]
    %v332 = vld [vmem:[#allocation6 + $0x308] sm:$0xff]
    %v333 = vld [vmem:[#allocation6 + $0x310] sm:$0xff]
    %v334 = vld [vmem:[#allocation6 + $0x318] sm:$0xff]
    %v335 = vld [vmem:[#allocation6 + $0x320] sm:$0xff]
    %v336 = vld [vmem:[#allocation6 + $0x328] sm:$0xff]
    %v337 = vld [vmem:[#allocation6 + $0x330] sm:$0xff]
    %v338 = vld [vmem:[#allocation6 + $0x338] sm:$0xff]
    %v339 = vld [vmem:[#allocation6 + $0x340] sm:$0xff]
    %v340 = vld [vmem:[#allocation6 + $0x348] sm:$0xff]
    %v341 = vld [vmem:[#allocation6 + $0x350] sm:$0xff]
    %v342 = vld [vmem:[#allocation6 + $0x358] sm:$0xff]
    %v343 = vld [vmem:[#allocation6 + $0x360] sm:$0xff]
    %v344 = vld [vmem:[#allocation6 + $0x368] sm:$0xff]
    %v345 = vld [vmem:[#allocation6 + $0x370] sm:$0xff]
    %v346 = vld [vmem:[#allocation6 + $0x378] sm:$0xff]
    %v347 = vld [vmem:[#allocation6 + $0x380] sm:$0xff]
    %v348 = vld [vmem:[#allocation6 + $0x388] sm:$0xff]
    %v349 = vld [vmem:[#allocation6 + $0x390] sm:$0xff]
    %v350 = vld [vmem:[#allocation6 + $0x398] sm:$0xff]
    %v351 = vld [vmem:[#allocation6 + $0x3a0] sm:$0xff]
    %v352 = vld [vmem:[#allocation6 + $0x3a8] sm:$0xff]
    %v353 = vld [vmem:[#allocation6 + $0x3b0] sm:$0xff]
    %v354 = vld [vmem:[#allocation6 + $0x3b8] sm:$0xff]
    %v355 = vld [vmem:[#allocation6 + $0x3c0] sm:$0xff]
    %v356 = vld [vmem:[#allocation6 + $0x3c8] sm:$0xff]
    %v357 = vld [vmem:[#allocation6 + $0x3d0] sm:$0xff]
    %v358 = vld [vmem:[#allocation6 + $0x3d8] sm:$0xff]
    %v359 = vld [vmem:[#allocation6 + $0x3e0] sm:$0xff]
    %v360 = vld [vmem:[#allocation6 + $0x3e8] sm:$0xff]
    %v361 = vld [vmem:[#allocation6 + $0x3f0] sm:$0xff]
    %v362 = vld [vmem:[#allocation6 + $0x3f8] sm:$0xff]
    %363 = vmatprep.subr.mxu0 %v236
    %364 = vmatpush1.msra.mxu0 %v235
    %365 = vmatprep.subr.mxu0 %v240
    %366 = vmatpush1.msra.mxu0 %v239
    %367 = vmatprep.subr.mxu0 %v244
    %368 = vmatpush1.msra.mxu0 %v243
    %369 = vmatprep.subr.mxu0 %v248
    %370 = vmatpush1.msra.mxu0 %v247
    %371 = vmatprep.subr.mxu0 %v252
    %372 = vmatpush1.msra.mxu0 %v251
    %373 = vmatprep.subr.mxu0 %v256
    %374 = vmatpush1.msra.mxu0 %v255
    %375 = vmatprep.subr.mxu0 %v260
    %376 = vmatpush1.msra.mxu0 %v259
    %377 = vmatprep.subr.mxu0 %v264
    %378 = vmatpush1.msra.mxu0 %v263
    %379 = vmatprep.subr.mxu0 %v268
    %380 = vmatpush1.msra.mxu0 %v267
    %381 = vmatprep.subr.mxu0 %v272
    %382 = vmatpush1.msra.mxu0 %v271
    %383 = vmatprep.subr.mxu0 %v276
    %384 = vmatpush1.msra.mxu0 %v275
    %385 = vmatprep.subr.mxu0 %v280
    %386 = vmatpush1.msra.mxu0 %v279
    %387 = vmatprep.subr.mxu0 %v284
    %388 = vmatpush1.msra.mxu0 %v283
    %389 = vmatprep.subr.mxu0 %v288
    %390 = vmatpush1.msra.mxu0 %v287
    %391 = vmatprep.subr.mxu0 %v292
    %392 = vmatpush1.msra.mxu0 %v291
    %393 = vmatprep.subr.mxu0 %v296
    %394 = vmatpush1.msra.mxu0 %v295
    %395 = vmatprep.subr.mxu0 %v300
    %396 = vmatpush1.msra.mxu0 %v299
    %397 = vmatprep.subr.mxu0 %v304
    %398 = vmatpush1.msra.mxu0 %v303
    %399 = vmatprep.subr.mxu0 %v308
    %400 = vmatpush1.msra.mxu0 %v307
    %401 = vmatprep.subr.mxu0 %v312
    %402 = vmatpush1.msra.mxu0 %v311
    %403 = vmatprep.subr.mxu0 %v316
    %404 = vmatpush1.msra.mxu0 %v315
    %405 = vmatprep.subr.mxu0 %v320
    %406 = vmatpush1.msra.mxu0 %v319
    %407 = vmatprep.subr.mxu0 %v324
    %408 = vmatpush1.msra.mxu0 %v323
    %409 = vmatprep.subr.mxu0 %v328
    %410 = vmatpush1.msra.mxu0 %v327
    %411 = vmatprep.subr.mxu0 %v332
    %412 = vmatpush1.msra.mxu0 %v331
    %413 = vmatprep.subr.mxu0 %v336
    %414 = vmatpush1.msra.mxu0 %v335
    %415 = vmatprep.subr.mxu0 %v340
    %416 = vmatpush1.msra.mxu0 %v339
    %417 = vmatprep.subr.mxu0 %v344
    %418 = vmatpush1.msra.mxu0 %v343
    %419 = vmatprep.subr.mxu0 %v348
    %420 = vmatpush1.msra.mxu0 %v347
    %421 = vmatprep.subr.mxu0 %v352
    %422 = vmatpush1.msra.mxu0 %v351
    %423 = vmatprep.subr.mxu0 %v356
    %424 = vmatpush1.msra.mxu0 %v355
    %425 = vmatprep.subr.mxu0 %v360
    %426 = vmatpush1.msra.mxu0 %v359
    %427 = vmatprep.mubr.f32.mxu0 %v232
    %428 = vmatmul.mubr.f32.gmra.mrb[0].mxu0 %v231
    %v429 = vpop.f32.mrb[0].mxu0
    %v430 = vadd.f32 0.0, %v429
    %v431 = vpop.f32.mrb[0].mxu0
    %v432 = vadd.f32 0.0, %v431
    %433 = vmatprep.mubr.f32.mxu0 %v234
    %434 = vmatmul.mubr.f32.gmra.mrb[0].mxu0 %v233
    %v435 = vpop.f32.mrb[0].mxu0
    %v436 = vadd.f32 0.0, %v435
    %v437 = vpop.f32.mrb[0].mxu0
    %v438 = vadd.f32 0.0, %v437
    %439 = vdwg.mxu0
    %440 = vmatprep.subr.mxu0 %v238
    %441 = vmatpush1.msra.mxu0 %v237
    %442 = vmatprep.subr.mxu0 %v242
    %443 = vmatpush1.msra.mxu0 %v241
    %444 = vmatprep.subr.mxu0 %v246
    %445 = vmatpush1.msra.mxu0 %v245
    %446 = vmatprep.subr.mxu0 %v250
    %447 = vmatpush1.msra.mxu0 %v249
    %448 = vmatprep.subr.mxu0 %v254
    %449 = vmatpush1.msra.mxu0 %v253
    %450 = vmatprep.subr.mxu0 %v258
    %451 = vmatpush1.msra.mxu0 %v257
    %452 = vmatprep.subr.mxu0 %v262
    %453 = vmatpush1.msra.mxu0 %v261
    %454 = vmatprep.subr.mxu0 %v266
    %455 = vmatpush1.msra.mxu0 %v265
    %456 = vmatprep.subr.mxu0 %v270
    %457 = vmatpush1.msra.mxu0 %v269
    %458 = vmatprep.subr.mxu0 %v274
    %459 = vmatpush1.msra.mxu0 %v273
    %460 = vmatprep.subr.mxu0 %v278
    %461 = vmatpush1.msra.mxu0 %v277
    %462 = vmatprep.subr.mxu0 %v282
    %463 = vmatpush1.msra.mxu0 %v281
    %464 = vmatprep.subr.mxu0 %v286
    %465 = vmatpush1.msra.mxu0 %v285
    %466 = vmatprep.subr.mxu0 %v290
    %467 = vmatpush1.msra.mxu0 %v289
    %468 = vmatprep.subr.mxu0 %v294
    %469 = vmatpush1.msra.mxu0 %v293
    %470 = vmatprep.subr.mxu0 %v298
    %471 = vmatpush1.msra.mxu0 %v297
    %472 = vmatprep.subr.mxu0 %v302
    %473 = vmatpush1.msra.mxu0 %v301
    %474 = vmatprep.subr.mxu0 %v306
    %475 = vmatpush1.msra.mxu0 %v305
    %476 = vmatprep.subr.mxu0 %v310
    %477 = vmatpush1.msra.mxu0 %v309
    %478 = vmatprep.subr.mxu0 %v314
    %479 = vmatpush1.msra.mxu0 %v313
    %480 = vmatprep.subr.mxu0 %v318
    %481 = vmatpush1.msra.mxu0 %v317
    %482 = vmatprep.subr.mxu0 %v322
    %483 = vmatpush1.msra.mxu0 %v321
    %484 = vmatprep.subr.mxu0 %v326
    %485 = vmatpush1.msra.mxu0 %v325
    %486 = vmatprep.subr.mxu0 %v330
    %487 = vmatpush1.msra.mxu0 %v329
    %488 = vmatprep.subr.mxu0 %v334
    %489 = vmatpush1.msra.mxu0 %v333
    %490 = vmatprep.subr.mxu0 %v338
    %491 = vmatpush1.msra.mxu0 %v337
    %492 = vmatprep.subr.mxu0 %v342
    %493 = vmatpush1.msra.mxu0 %v341
    %494 = vmatprep.subr.mxu0 %v346
    %495 = vmatpush1.msra.mxu0 %v345
    %496 = vmatprep.subr.mxu0 %v350
    %497 = vmatpush1.msra.mxu0 %v349
    %498 = vmatprep.subr.mxu0 %v354
    %499 = vmatpush1.msra.mxu0 %v353
    %500 = vmatprep.subr.mxu0 %v358
    %501 = vmatpush1.msra.mxu0 %v357
    %502 = vmatprep.subr.mxu0 %v362
    %503 = vmatpush1.msra.mxu0 %v361
    %504 = vmatprep.mubr.f32.mxu0 %v232
    %505 = vmatmul.mubr.f32.gmra.mrb[0].mxu0 %v231
    %v506 = vpop.f32.mrb[0].mxu0
    %v507 = vadd.f32 0.0, %v506
    %v508 = vpop.f32.mrb[0].mxu0
    %v509 = vadd.f32 0.0, %v508
    %510 = vmatprep.mubr.f32.mxu0 %v234
    %511 = vmatmul.mubr.f32.gmra.mrb[0].mxu0 %v233
    %v512 = vpop.f32.mrb[0].mxu0
    %v513 = vadd.f32 0.0, %v512
    %v514 = vpop.f32.mrb[0].mxu0
    %v515 = vadd.f32 0.0, %v514
    %516 = vdwg.mxu0
    %v517 = vmax.f32 %v430, %v432
    %v518 = vmax.f32 %v436, %v438
    %v519 = vmax.f32 %v507, %v509
    %v520 = vmax.f32 %v513, %v515
    %v521 = vmax.f32 %v517, %v519
    %v522 = vmax.f32 %v518, %v520
    %v523 = vld [vmem:[#allocation8] sm:$0xff]
    %v524 = vld [vmem:[#allocation8 + $0x8] sm:$0xff]
    %v525 = vld [vmem:[#allocation8 + $0x10] sm:$0xff]
    %v526 = vld [vmem:[#allocation8 + $0x18] sm:$0xff]
    %v527 = vld [vmem:[#allocation8 + $0x20] sm:$0xff]
    %v528 = vld [vmem:[#allocation8 + $0x28] sm:$0xff]
    %v529 = vld [vmem:[#allocation8 + $0x30] sm:$0xff]
    %v530 = vld [vmem:[#allocation8 + $0x38] sm:$0xff]
    %v531 = vld [vmem:[#allocation8 + $0x40] sm:$0xff]
    %v532 = vld [vmem:[#allocation8 + $0x48] sm:$0xff]
    %v533 = vld [vmem:[#allocation8 + $0x50] sm:$0xff]
    %v534 = vld [vmem:[#allocation8 + $0x58] sm:$0xff]
    %v535 = vld [vmem:[#allocation8 + $0x60] sm:$0xff]
    %v536 = vld [vmem:[#allocation8 + $0x68] sm:$0xff]
    %v537 = vld [vmem:[#allocation8 + $0x70] sm:$0xff]
    %v538 = vld [vmem:[#allocation8 + $0x78] sm:$0xff]
    %v539 = vld [vmem:[%s3] sm:$0x1]
    %v541 = vlaneseq
    %v542 = vshrl.u32 %v541, 7
    %v543 = vsub.s32 0, %v542
    %v544 = vrot.slane %v539, %v543
    %546 = vmatprep.subr.mxu0 0.0
    %547 = vmatpush1.msra.mxu0 %v523
    %548 = vmatprep.subr.mxu0 0.0
    %549 = vmatpush1.msra.mxu0 %v524
    %550 = vmatprep.subr.mxu0 0.0
    %551 = vmatpush1.msra.mxu0 %v525
    %552 = vmatprep.subr.mxu0 0.0
    %553 = vmatpush1.msra.mxu0 %v526
    %554 = vmatprep.subr.mxu0 0.0
    %555 = vmatpush1.msra.mxu0 %v527
    %556 = vmatprep.subr.mxu0 0.0
    %557 = vmatpush1.msra.mxu0 %v528
    %558 = vmatprep.subr.mxu0 0.0
    %559 = vmatpush1.msra.mxu0 %v529
    %560 = vmatprep.subr.mxu0 0.0
    %561 = vmatpush1.msra.mxu0 %v530
    %562 = vmatprep.subr.mxu0 0.0
    %563 = vmatpush1.msra.mxu0 %v531
    %564 = vmatprep.subr.mxu0 0.0
    %565 = vmatpush1.msra.mxu0 %v532
    %566 = vmatprep.subr.mxu0 0.0
    %567 = vmatpush1.msra.mxu0 %v533
    %568 = vmatprep.subr.mxu0 0.0
    %569 = vmatpush1.msra.mxu0 %v534
    %570 = vmatprep.subr.mxu0 0.0
    %571 = vmatpush1.msra.mxu0 %v535
    %572 = vmatprep.subr.mxu0 0.0
    %573 = vmatpush1.msra.mxu0 %v536
    %574 = vmatprep.subr.mxu0 0.0
    %575 = vmatpush1.msra.mxu0 %v537
    %576 = vmatprep.subr.mxu0 0.0
    %577 = vmatpush1.msra.mxu0 %v538
    %578 = vmatprep.subr.mxu0 0.0
    %579 = vmatpush1.msra.mxu0 0.0
    %580 = vmatprep.subr.mxu0 0.0
    %581 = vmatpush1.msra.mxu0 0.0
    %582 = vmatprep.subr.mxu0 0.0
    %583 = vmatpush1.msra.mxu0 0.0
    %584 = vmatprep.subr.mxu0 0.0
    %585 = vmatpush1.msra.mxu0 0.0
    %586 = vmatprep.subr.mxu0 0.0
    %587 = vmatpush1.msra.mxu0 0.0
    %588 = vmatprep.subr.mxu0 0.0
    %589 = vmatpush1.msra.mxu0 0.0
    %590 = vmatprep.subr.mxu0 0.0
    %591 = vmatpush1.msra.mxu0 0.0
    %592 = vmatprep.subr.mxu0 0.0
    %593 = vmatpush1.msra.mxu0 0.0
    %594 = vmatprep.subr.mxu0 0.0
    %595 = vmatpush1.msra.mxu0 0.0
    %596 = vmatprep.subr.mxu0 0.0
    %597 = vmatpush1.msra.mxu0 0.0
    %598 = vmatprep.subr.mxu0 0.0
    %599 = vmatpush1.msra.mxu0 0.0
    %600 = vmatprep.subr.mxu0 0.0
    %601 = vmatpush1.msra.mxu0 0.0
    %602 = vmatprep.subr.mxu0 0.0
    %603 = vmatpush1.msra.mxu0 0.0
    %604 = vmatprep.subr.mxu0 0.0
    %605 = vmatpush1.msra.mxu0 0.0
    %606 = vmatprep.subr.mxu0 0.0
    %607 = vmatpush1.msra.mxu0 0.0
    %608 = vmatprep.subr.mxu0 0.0
    %609 = vmatpush1.msra.mxu0 0.0
    %610 = vmatprep.mubr.f32.mxu0 0.0
    %611 = vmatmul.mubr.f32.gmra.mrb[0].mxu0 %v521
    %v612 = vpop.f32.mrb[0].mxu0
    %v613 = vadd.f32 %v544, %v612
    %v614 = vpop.f32.mrb[0].mxu0
    %615 = vmatprep.mubr.f32.mxu0 0.0
    %616 = vmatmul.mubr.f32.gmra.mrb[0].mxu0 %v522
    %v617 = vpop.f32.mrb[0].mxu0
    %v618 = vadd.f32 %v544, %v617
    %v619 = vpop.f32.mrb[0].mxu0
    %620 = vdwg.mxu0
    %vm621 = vcmp.gt.f32.partialorder -1.0, 0.0
    %v622 = vsel %vm621, 1, 0
    %v623 = vcvt.s32.f32 %v622
    %v624 = vsub.f32 1.0, %v623
    %v625 = vmul.f32 %v624, 0.0
    %v626 = vadd.f32 %v613, 0.0
    %v627 = vadd.f32 %v623, 0.0
    %628 = vst [vmem:[#allocation10] sm:$0x3] %v625
    %629 = vst [vmem:[#allocation12] sm:$0x3] %v623
    %v630 = vsub.f32 %v626, %v625
    %v631 = vmul.f32 %v630, 0.1
    %v632 = vadd.f32 %v625, %v631
    %v633 = vmul.f32 %v626, 0.2
    %v634 = vsub.f32 %v626, %v633
    %v635 = vsub.f32 %v632, 1.0
    %vm636 = vcmp.gt.f32.partialorder %v635, 0.0
    %v637 = vsel %vm636, 1, 0
    %v638 = vcvt.s32.f32 %v637
    %v639 = vsub.f32 1.0, %v638
    %v640 = vmul.f32 %v639, %v632
    %v642 = vrot.slane %v613, 2
    %v644 = vadd.f32 %v634, %v642
    %v645 = vadd.f32 %v627, %v638
    %s646 = scalar_lea.vmem [#allocation10], 2
    %647 = vst [vmem:[%s646] sm:$0x3] %v640
    %s648 = scalar_lea.vmem [#allocation12], 2
    %649 = vst [vmem:[%s648] sm:$0x3] %v638
    %v650 = vsub.f32 %v644, %v640
    %v651 = vmul.f32 %v650, 0.1
    %v652 = vadd.f32 %v640, %v651
    %v653 = vmul.f32 %v644, 0.2
    %v654 = vsub.f32 %v644, %v653
    %v655 = vsub.f32 %v652, 1.0
    %vm656 = vcmp.gt.f32.partialorder %v655, 0.0
    %v657 = vsel %vm656, 1, 0
    %v658 = vcvt.s32.f32 %v657
    %v659 = vsub.f32 1.0, %v658
    %v660 = vmul.f32 %v659, %v652
    %v661 = vrot.slane %v613, 4
    %v663 = vadd.f32 %v654, %v661
    %v664 = vadd.f32 %v645, %v658
    %s665 = scalar_lea.vmem [#allocation10], 4
    %666 = vst [vmem:[%s665] sm:$0x3] %v660
    %s667 = scalar_lea.vmem [#allocation12], 4
    %668 = vst [vmem:[%s667] sm:$0x3] %v658
    %v669 = vsub.f32 %v663, %v660
    %v670 = vmul.f32 %v669, 0.1
    %v671 = vadd.f32 %v660, %v670
    %v672 = vmul.f32 %v663, 0.2
    %v673 = vsub.f32 %v663, %v672
    %v674 = vsub.f32 %v671, 1.0
    %vm675 = vcmp.gt.f32.partialorder %v674, 0.0
    %v676 = vsel %vm675, 1, 0
    %v677 = vcvt.s32.f32 %v676
    %v678 = vsub.f32 1.0, %v677
    %v679 = vmul.f32 %v678, %v671
    %v680 = vrot.slane %v613, 6
    %v682 = vadd.f32 %v673, %v680
    %v683 = vadd.f32 %v664, %v677
    %s684 = scalar_lea.vmem [#allocation10], 6
    %685 = vst [vmem:[%s684] sm:$0x3] %v679
    %s686 = scalar_lea.vmem [#allocation12], 6
    %687 = vst [vmem:[%s686] sm:$0x3] %v677
    %v688 = vsub.f32 %v682, %v679
    %v689 = vmul.f32 %v688, 0.1
    %v690 = vadd.f32 %v679, %v689
    %v691 = vmul.f32 %v682, 0.2
    %v692 = vsub.f32 %v682, %v691
    %v693 = vsub.f32 %v690, 1.0
    %vm694 = vcmp.gt.f32.partialorder %v693, 0.0
    %v695 = vsel %vm694, 1, 0
    %v696 = vcvt.s32.f32 %v695
    %v697 = vsub.f32 1.0, %v696
    %v698 = vmul.f32 %v697, %v690
    %v699 = vadd.f32 %v692, %v618
    %v700 = vadd.f32 %v683, %v696
    %s701 = scalar_lea.vmem [#allocation10], 8
    %702 = vst [vmem:[%s701] sm:$0x3] %v698
    %s703 = scalar_lea.vmem [#allocation12], 8
    %704 = vst [vmem:[%s703] sm:$0x3] %v696
    %v705 = vsub.f32 %v699, %v698
    %v706 = vmul.f32 %v705, 0.1
    %v707 = vadd.f32 %v698, %v706
    %v708 = vmul.f32 %v699, 0.2
    %v709 = vsub.f32 %v699, %v708
    %v710 = vsub.f32 %v707, 1.0
    %vm711 = vcmp.gt.f32.partialorder %v710, 0.0
    %v712 = vsel %vm711, 1, 0
    %v713 = vcvt.s32.f32 %v712
    %v714 = vsub.f32 1.0, %v713
    %v715 = vmul.f32 %v714, %v707
    %v717 = vrot.slane %v618, 2
    %v719 = vadd.f32 %v709, %v717
    %v720 = vadd.f32 %v700, %v713
    %s721 = scalar_lea.vmem [#allocation10], 10
    %722 = vst [vmem:[%s721] sm:$0x3] %v715
    %s723 = scalar_lea.vmem [#allocation12], 10
    %724 = vst [vmem:[%s723] sm:$0x3] %v713
    %v725 = vsub.f32 %v719, %v715
    %v726 = vmul.f32 %v725, 0.1
    %v727 = vadd.f32 %v715, %v726
    %v728 = vmul.f32 %v719, 0.2
    %v729 = vsub.f32 %v719, %v728
    %v730 = vsub.f32 %v727, 1.0
    %vm731 = vcmp.gt.f32.partialorder %v730, 0.0
    %v732 = vsel %vm731, 1, 0
    %v733 = vcvt.s32.f32 %v732
    %v734 = vsub.f32 1.0, %v733
    %v735 = vmul.f32 %v734, %v727
    %v736 = vrot.slane %v618, 4
    %v738 = vadd.f32 %v729, %v736
    %v739 = vadd.f32 %v720, %v733
    %s740 = scalar_lea.vmem [#allocation10], 12
    %741 = vst [vmem:[%s740] sm:$0x3] %v735
    %s742 = scalar_lea.vmem [#allocation12], 12
    %743 = vst [vmem:[%s742] sm:$0x3] %v733
    %v744 = vsub.f32 %v738, %v735
    %v745 = vmul.f32 %v744, 0.1
    %v746 = vadd.f32 %v735, %v745
    %v747 = vsub.f32 %v746, 1.0
    %vm748 = vcmp.gt.f32.partialorder %v747, 0.0
    %v749 = vsel %vm748, 1, 0
    %v750 = vcvt.s32.f32 %v749
    %v751 = vsub.f32 1.0, %v750
    %v752 = vmul.f32 %v751, %v746
    %v753 = vadd.f32 %v739, %v750
    %s754 = scalar_lea.vmem [#allocation10], 14
    %755 = vst [vmem:[%s754] sm:$0x3] %v752
    %s756 = scalar_lea.vmem [#allocation12], 14
    %757 = vst [vmem:[%s756] sm:$0x3] %v750
    %758 = vst [vmem:[#allocation9] sm:$0x3] %v753
    // Predicated region
    $region30: #{tpu_custom_call.1} parent=1 // pred_check
      _
    $region31: #{tpu_custom_call.1} parent=1 // pred_check_branch
      %760 = sbr.rel (0) target = $region33
    $region32: #{tpu_custom_call.1} parent=1 // pred_region
      %s762 = ssub.s32 32, 32
      %763 = vsyncadd [#allocation5], %s762
      %s765 = sshll.u32 [#allocation9], 4
      %s766 = int_to_ptr.vmem [resolvable:$true] %s765
      %768 = dma.vmem_to_hbm [thread:$0]  %s766, 32, %s4, [#allocation5]
    $region33: #{tpu_custom_call.1} parent=1 // pred_fallthru
      _
    // Predicated region
    $region34: #{tpu_custom_call.1} parent=1 // pred_check
      _
    $region35: #{tpu_custom_call.1} parent=1 // pred_check_branch
      %770 = sbr.rel (0) target = $region37
    $region36: #{tpu_custom_call.1} parent=1 // pred_region
      %s772 = ssub.s32 256, 256
      %773 = vsyncadd [#allocation11], %s772
      %s774 = sshll.u32 [#allocation10], 4
      %s775 = int_to_ptr.vmem [resolvable:$true] %s774
      %780 = dma.vmem_to_hbm [thread:$0]  %s775, 256, %s5, [#allocation11], 32, 32, 2
    $region37: #{tpu_custom_call.1} parent=1 // pred_fallthru
      _
    // Predicated region
    $region38: #{tpu_custom_call.1} parent=1 // pred_check
      _
    $region39: #{tpu_custom_call.1} parent=1 // pred_check_branch
      %782 = sbr.rel (0) target = $region41
    $region40: #{tpu_custom_call.1} parent=1 // pred_region
      %s784 = ssub.s32 256, 256
      %785 = vsyncadd [#allocation11], %s784
      %s786 = sshll.u32 [#allocation12], 4
      %s787 = int_to_ptr.vmem [resolvable:$true] %s786
      %792 = dma.vmem_to_hbm [thread:$0]  %s787, 256, %s6, [#allocation11], 32, 32, 2
    $region41: #{tpu_custom_call.1} parent=1 // pred_fallthru
      _
    // Predicated region
    $region42: #{tpu_custom_call.1} parent=1 // pred_check
      _
    $region43: #{tpu_custom_call.1} parent=1 // pred_check_branch
      %794 = sbr.rel (0) target = $region45
    $region44: #{tpu_custom_call.1} parent=1 // pred_region
      %795 = dma.done [#allocation5], 32
    $region45: #{tpu_custom_call.1} parent=1 // pred_fallthru
      _
    // Predicated region
    $region46: #{tpu_custom_call.1} parent=1 // pred_check
      _
    $region47: #{tpu_custom_call.1} parent=1 // pred_check_branch
      %797 = sbr.rel (0) target = $region49
    $region48: #{tpu_custom_call.1} parent=1 // pred_region
      %798 = dma.done [#allocation11], 256
    $region49: #{tpu_custom_call.1} parent=1 // pred_fallthru
      _
    // Predicated region
    $region50: #{tpu_custom_call.1} parent=1 // pred_check
      _
    $region51: #{tpu_custom_call.1} parent=1 // pred_check_branch
      %800 = sbr.rel (0) target = $region53
    $region52: #{tpu_custom_call.1} parent=1 // pred_region
      %801 = dma.done [#allocation11], 256
    $region53: #{tpu_custom_call.1} parent=1 // pred_fallthru
      _
    %802 = vsyncpa [#allocation4], 1
    %803 = vsyncpa [#allocation7], 1
    %804 = vsyncpa [#allocation5], 1
    %805 = vsyncpa [#allocation11], 1

</llo_original>
